<compile_context>
chip_gen: v6e
topology: v6e:2x2x1
jax: 0.10.0
libtpu: 0.0.40
codegen_flags: <defaults>
</compile_context>

<pallas_src>
import functools

import jax
import jax.numpy as jnp
from jax.experimental import pallas as pl
from jax.experimental.pallas import tpu as pltpu

EPS = 1e-5  # PyTorch LayerNorm default eps


def _layer_norm(x, gamma, beta):
    mu = jnp.mean(x, axis=-1, keepdims=True)
    var = jnp.mean((x - mu) ** 2, axis=-1, keepdims=True)
    return (x - mu) * jax.lax.rsqrt(var + EPS) * gamma + beta


def _swap_leading_dims(x):
    """(P, Q, E) -> (Q, P, E) keeping E as the lane dim.

    Implemented with static slices + concatenate (unrolled over the smaller of
    P, Q) so it lowers to plain sublane copies — no rank-3 transpose needed.
    """
    P, Q, E = x.shape
    if P == 1 or Q == 1:
        return x.reshape(Q, P, E)
    if Q <= P:
        parts = [x[:, q:q + 1, :].reshape(1, P, E) for q in range(Q)]
        return jnp.concatenate(parts, axis=0)
    parts = [x[p:p + 1, :, :].reshape(Q, 1, E) for p in range(P)]
    return jnp.concatenate(parts, axis=1)


def cross_domain_attn_kernel(a_ref, b_ref,
                             wq_ref, bq_ref, wk_ref, bk_ref, wv_ref, bv_ref,
                             wo_ref, bo_ref,
                             g1_ref, be1_ref,
                             w1_ref, b1_ref, w2_ref, b2_ref,
                             g2_ref, be2_ref,
                             out_ref,
                             *, num_heads):
    Sa, bb, E = a_ref.shape          # A block: (Sa, bb, E)
    Sb = b_ref.shape[0]              # B block: (Sb, bb, E)
    H = num_heads
    d = E // H
    N = bb * Sa                      # merged query rows (batch-major)
    M = bb * Sb                      # merged key/value rows (batch-major)

    # ---- load; bring batch in front of seq; merge rows (leading reshape) ----
    A_bse = _swap_leading_dims(a_ref[...])             # (bb, Sa, E)
    B_bse = _swap_leading_dims(b_ref[...])             # (bb, Sb, E)
    A_f32 = A_bse.reshape(N, E).astype(jnp.float32)    # rows ordered (batch, seq)
    A_bf = A_f32.astype(jnp.bfloat16)
    B_bf = B_bse.reshape(M, E).astype(jnp.bfloat16)

    # ---- full-lane-width in-projections (bf16 MXU, f32 accumulation) ----
    # wq/bq are pre-scaled by 1/sqrt(d) in the wrapper.
    q = jnp.dot(A_bf, wq_ref[...], preferred_element_type=jnp.float32) + bq_ref[...]
    k = jnp.dot(B_bf, wk_ref[...], preferred_element_type=jnp.float32) + bk_ref[...]
    v = jnp.dot(B_bf, wv_ref[...], preferred_element_type=jnp.float32) + bv_ref[...]

    # ---- split heads: (N, E) -> (H*bb, S, d); group index g = h*bb + b ----
    def split_heads(x, S):
        xs = [x[:, h * d:(h + 1) * d].astype(jnp.bfloat16) for h in range(H)]
        return jnp.stack(xs, axis=0).reshape(H * bb, S, d)

    q3 = split_heads(q, Sa)                             # (H*bb, Sa, d)
    k3 = split_heads(k, Sb)                             # (H*bb, Sb, d)
    v3 = split_heads(v, Sb)                             # (H*bb, Sb, d)

    # ---- scaled dot-product attention per (head, batch) group ----
    s = jnp.einsum('gqd,gkd->gqk', q3, k3,
                   preferred_element_type=jnp.float32)  # (H*bb, Sa, Sb)
    s = s - jnp.max(s, axis=-1, keepdims=True)
    p = jnp.exp(s)
    p = p * pl.reciprocal(jnp.sum(p, axis=-1, keepdims=True), approx=True)
    o = jnp.einsum('gqk,gkd->gqd', p.astype(jnp.bfloat16), v3,
                   preferred_element_type=jnp.float32)  # (H*bb, Sa, d)

    # ---- merge heads back to (N, E) (head-major features) + out projection --
    o4 = o.astype(jnp.bfloat16).reshape(H, bb, Sa, d)
    o2d = jnp.concatenate([o4[h].reshape(N, d) for h in range(H)], axis=-1)
    C = jnp.dot(o2d, wo_ref[...], preferred_element_type=jnp.float32) + bo_ref[...]

    # ---- residual + LayerNorm 1 (f32) ----
    a_prime = _layer_norm(A_f32 + C, g1_ref[...], be1_ref[...])

    # ---- FFN: Linear -> ReLU -> Linear (bf16 matmuls, f32 accumulate) ----
    h1 = jnp.dot(a_prime.astype(jnp.bfloat16), w1_ref[...],
                 preferred_element_type=jnp.float32) + b1_ref[...]
    h1 = jnp.maximum(h1, 0.0)
    ff = jnp.dot(h1.astype(jnp.bfloat16), w2_ref[...],
                 preferred_element_type=jnp.float32) + b2_ref[...]

    # ---- residual + LayerNorm 2; store back in native (seq, batch, E) layout
    out = _layer_norm(a_prime + ff, g2_ref[...], be2_ref[...])
    out_ref[...] = _swap_leading_dims(out.reshape(bb, Sa, E)).astype(out_ref.dtype)


def _pick_batch_block(batch, s_max):
    """Largest batch block whose second-minor block dim is layout-legal
    (== batch or a multiple of 8); prefer >= 2 grid steps (megacore) and
    <= 256 merged rows per step."""
    cands = [c for c in range(1, batch + 1)
             if batch % c == 0 and (c == batch or c % 8 == 0)]
    fitting = [c for c in cands if c * s_max <= 256]
    multi = [c for c in fitting if batch // c >= 2]
    if multi:
        return max(multi)
    if fitting:
        return max(fitting)
    return min(cands)


def cross_domain_attention(A_sbe, B_sbe, params, *, num_heads, batch_block=None):
    """A_sbe: (seq_a, batch, embed); B_sbe: (seq_b, batch, embed).

    Returns (seq_a, batch, embed). No host-side transposes: the kernel indexes
    the native sequence-major layout directly.
    """
    Sa, batch, E = A_sbe.shape
    Sb = B_sbe.shape[0]
    assert B_sbe.shape[1] == batch and B_sbe.shape[2] == E
    assert E % num_heads == 0, "embed_dim must be divisible by num_heads"
    d = E // num_heads
    ff_dim = params["w1"].shape[1]

    bb = batch_block if batch_block is not None else _pick_batch_block(batch, max(Sa, Sb))
    assert batch % bb == 0
    nb = batch // bb

    # Fold 1/sqrt(d) into the q projection; pre-cast matmul weights to bf16.
    scale = 1.0 / float(d) ** 0.5
    wq = (params["wq"] * scale).astype(jnp.bfloat16)
    bq = (params["bq"] * scale).astype(jnp.float32)
    wk = params["wk"].astype(jnp.bfloat16)
    wv = params["wv"].astype(jnp.bfloat16)
    wo = params["wo"].astype(jnp.bfloat16)
    w1 = params["w1"].astype(jnp.bfloat16)
    w2 = params["w2"].astype(jnp.bfloat16)

    def full_spec(shape):
        nd = len(shape)
        return pl.BlockSpec(shape, lambda i, _nd=nd: (0,) * _nd)

    grid_spec = pltpu.PrefetchScalarGridSpec(
        num_scalar_prefetch=0,
        grid=(nb,),
        in_specs=[
            pl.BlockSpec((Sa, bb, E), lambda i: (0, i, 0)),   # A (seq-major)
            pl.BlockSpec((Sb, bb, E), lambda i: (0, i, 0)),   # B (seq-major)
            full_spec((E, E)), full_spec((1, E)),             # wq, bq (scaled)
            full_spec((E, E)), full_spec((1, E)),             # wk, bk
            full_spec((E, E)), full_spec((1, E)),             # wv, bv
            full_spec((E, E)), full_spec((1, E)),             # wo, bo
            full_spec((1, E)), full_spec((1, E)),             # ln1 gamma/beta
            full_spec((E, ff_dim)), full_spec((1, ff_dim)),   # w1, b1
            full_spec((ff_dim, E)), full_spec((1, E)),        # w2, b2
            full_spec((1, E)), full_spec((1, E)),             # ln2 gamma/beta
        ],
        out_specs=pl.BlockSpec((Sa, bb, E), lambda i: (0, i, 0)),
    )

    # VMEM hint: bf16 weights (double-buffered) + rough f32 activation slab.
    G = num_heads * bb
    weight_bytes = 2 * 2 * (4 * E * E + 2 * E * ff_dim)
    act_bytes = 4 * (6 * bb * Sa * E + 3 * bb * Sb * E
                     + 2 * G * Sa * Sb + bb * Sa * ff_dim)
    vmem_limit = int(min(64 * 1024 * 1024,
                         max(32 * 1024 * 1024, 2 * (weight_bytes + act_bytes))))

    out = pl.pallas_call(
        functools.partial(cross_domain_attn_kernel, num_heads=num_heads),
        grid_spec=grid_spec,
        out_shape=jax.ShapeDtypeStruct((Sa, batch, E), A_sbe.dtype),
        compiler_params=pltpu.CompilerParams(
            dimension_semantics=("parallel",),
            vmem_limit_bytes=vmem_limit),
    )(A_sbe, B_sbe,
      wq, bq, wk, params["bk"], wv, params["bv"], wo, params["bo"],
      params["g1"], params["be1"], w1, params["b1"],
      w2, params["b2"], params["g2"], params["be2"])
    return out


def init_params(key, embed_dim, ff_dim):
    """Deterministic parameter init.

    Weights are stored transposed relative to PyTorch nn.Linear (so the kernel
    computes x @ W); biases are stored as (1, dim).
    """
    ks = jax.random.split(key, 8)
    s = 0.05
    return {
        "wq": s * jax.random.normal(ks[0], (embed_dim, embed_dim), jnp.float32),
        "wk": s * jax.random.normal(ks[1], (embed_dim, embed_dim), jnp.float32),
        "wv": s * jax.random.normal(ks[2], (embed_dim, embed_dim), jnp.float32),
        "wo": s * jax.random.normal(ks[3], (embed_dim, embed_dim), jnp.float32),
        "bq": s * jax.random.normal(ks[4], (1, embed_dim), jnp.float32),
        "bk": jnp.zeros((1, embed_dim), jnp.float32),
        "bv": jnp.zeros((1, embed_dim), jnp.float32),
        "bo": jnp.zeros((1, embed_dim), jnp.float32),
        "g1": jnp.ones((1, embed_dim), jnp.float32),
        "be1": jnp.zeros((1, embed_dim), jnp.float32),
        "w1": s * jax.random.normal(ks[5], (embed_dim, ff_dim), jnp.float32),
        "b1": s * jax.random.normal(ks[6], (1, ff_dim), jnp.float32),
        "w2": s * jax.random.normal(ks[7], (ff_dim, embed_dim), jnp.float32),
        "b2": jnp.zeros((1, embed_dim), jnp.float32),
        "g2": jnp.ones((1, embed_dim), jnp.float32),
        "be2": jnp.zeros((1, embed_dim), jnp.float32),
    }


if __name__ == "__main__":
    seq_len_a, seq_len_b, batch = 8, 8, 2
    embed_dim, num_heads, ff_dim = 32, 4, 64

    key = jax.random.PRNGKey(0)
    ka, kb, kp = jax.random.split(key, 3)
    A = jax.random.normal(ka, (seq_len_a, batch, embed_dim), jnp.float32)
    B = jax.random.normal(kb, (seq_len_b, batch, embed_dim), jnp.float32)
    params = init_params(kp, embed_dim, ff_dim)

    out = cross_domain_attention(A, B, params, num_heads=num_heads)
    out = jax.block_until_ready(out)
    assert out.shape == (seq_len_a, batch, embed_dim)
    assert jnp.all(jnp.isfinite(out))
    print("KERNEL_OK")
</pallas_src>

<mosaic_0001>
module attributes {stable_mosaic.version = 11 : i64} {
  func.func @cross_domain_attn_kernel(%arg0: i32, %arg1: memref<8x2x32xf32, #tpu.memory_space<vmem>>, %arg2: memref<8x2x32xf32, #tpu.memory_space<vmem>>, %arg3: memref<32x32xbf16, #tpu.memory_space<vmem>>, %arg4: memref<1x32xf32, #tpu.memory_space<vmem>>, %arg5: memref<32x32xbf16, #tpu.memory_space<vmem>>, %arg6: memref<1x32xf32, #tpu.memory_space<vmem>>, %arg7: memref<32x32xbf16, #tpu.memory_space<vmem>>, %arg8: memref<1x32xf32, #tpu.memory_space<vmem>>, %arg9: memref<32x32xbf16, #tpu.memory_space<vmem>>, %arg10: memref<1x32xf32, #tpu.memory_space<vmem>>, %arg11: memref<1x32xf32, #tpu.memory_space<vmem>>, %arg12: memref<1x32xf32, #tpu.memory_space<vmem>>, %arg13: memref<32x64xbf16, #tpu.memory_space<vmem>>, %arg14: memref<1x64xf32, #tpu.memory_space<vmem>>, %arg15: memref<64x32xbf16, #tpu.memory_space<vmem>>, %arg16: memref<1x32xf32, #tpu.memory_space<vmem>>, %arg17: memref<1x32xf32, #tpu.memory_space<vmem>>, %arg18: memref<1x32xf32, #tpu.memory_space<vmem>>, %arg19: memref<8x2x32xf32, #tpu.memory_space<vmem>>) attributes {dimension_semantics = [#tpu.dimension_semantics<parallel>], iteration_bounds = array<i64: 1>, scalar_prefetch = 0 : i64, scratch_operands = 0 : i64, tpu.core_type = #tpu.core_type<tc>, window_params = [{transform_indices = @transform_0, window_bounds = array<i64: 8, 2, 32>}, {transform_indices = @transform_1, window_bounds = array<i64: 8, 2, 32>}, {pipeline_mode = #tpu.pipeline_mode<synchronous>, transform_indices = @transform_2, window_bounds = array<i64: 32, 32>}, {pipeline_mode = #tpu.pipeline_mode<synchronous>, transform_indices = @transform_3, window_bounds = array<i64: 1, 32>}, {pipeline_mode = #tpu.pipeline_mode<synchronous>, transform_indices = @transform_4, window_bounds = array<i64: 32, 32>}, {pipeline_mode = #tpu.pipeline_mode<synchronous>, transform_indices = @transform_5, window_bounds = array<i64: 1, 32>}, {pipeline_mode = #tpu.pipeline_mode<synchronous>, transform_indices = @transform_6, window_bounds = array<i64: 32, 32>}, {pipeline_mode = #tpu.pipeline_mode<synchronous>, transform_indices = @transform_7, window_bounds = array<i64: 1, 32>}, {pipeline_mode = #tpu.pipeline_mode<synchronous>, transform_indices = @transform_8, window_bounds = array<i64: 32, 32>}, {pipeline_mode = #tpu.pipeline_mode<synchronous>, transform_indices = @transform_9, window_bounds = array<i64: 1, 32>}, {pipeline_mode = #tpu.pipeline_mode<synchronous>, transform_indices = @transform_10, window_bounds = array<i64: 1, 32>}, {pipeline_mode = #tpu.pipeline_mode<synchronous>, transform_indices = @transform_11, window_bounds = array<i64: 1, 32>}, {pipeline_mode = #tpu.pipeline_mode<synchronous>, transform_indices = @transform_12, window_bounds = array<i64: 32, 64>}, {pipeline_mode = #tpu.pipeline_mode<synchronous>, transform_indices = @transform_13, window_bounds = array<i64: 1, 64>}, {pipeline_mode = #tpu.pipeline_mode<synchronous>, transform_indices = @transform_14, window_bounds = array<i64: 64, 32>}, {pipeline_mode = #tpu.pipeline_mode<synchronous>, transform_indices = @transform_15, window_bounds = array<i64: 1, 32>}, {pipeline_mode = #tpu.pipeline_mode<synchronous>, transform_indices = @transform_16, window_bounds = array<i64: 1, 32>}, {pipeline_mode = #tpu.pipeline_mode<synchronous>, transform_indices = @transform_17, window_bounds = array<i64: 1, 32>}, {transform_indices = @transform_18, window_bounds = array<i64: 8, 2, 32>}]} {
    %c0 = arith.constant 0 : index
    %c0_0 = arith.constant 0 : index
    %c0_1 = arith.constant 0 : index
    %0 = vector.load %arg1[%c0, %c0_0, %c0_1] : memref<8x2x32xf32, #tpu.memory_space<vmem>>, vector<8x2x32xf32>
    %1 = vector.extract_strided_slice %0 {offsets = [0, 0, 0], sizes = [8, 1, 32], strides = [1, 1, 1]} : vector<8x2x32xf32> to vector<8x1x32xf32>
    %2 = vector.shape_cast %1 : vector<8x1x32xf32> to vector<1x8x32xf32>
    %3 = vector.extract_strided_slice %0 {offsets = [0, 1, 0], sizes = [8, 1, 32], strides = [1, 1, 1]} : vector<8x2x32xf32> to vector<8x1x32xf32>
    %4 = vector.shape_cast %3 : vector<8x1x32xf32> to vector<1x8x32xf32>
    %5 = tpu.concatenate %2, %4 in 0 : vector<1x8x32xf32>, vector<1x8x32xf32> -> vector<2x8x32xf32>
    %c0_2 = arith.constant 0 : index
    %c0_3 = arith.constant 0 : index
    %c0_4 = arith.constant 0 : index
    %6 = vector.load %arg2[%c0_2, %c0_3, %c0_4] : memref<8x2x32xf32, #tpu.memory_space<vmem>>, vector<8x2x32xf32>
    %7 = vector.extract_strided_slice %6 {offsets = [0, 0, 0], sizes = [8, 1, 32], strides = [1, 1, 1]} : vector<8x2x32xf32> to vector<8x1x32xf32>
    %8 = vector.shape_cast %7 : vector<8x1x32xf32> to vector<1x8x32xf32>
    %9 = vector.extract_strided_slice %6 {offsets = [0, 1, 0], sizes = [8, 1, 32], strides = [1, 1, 1]} : vector<8x2x32xf32> to vector<8x1x32xf32>
    %10 = vector.shape_cast %9 : vector<8x1x32xf32> to vector<1x8x32xf32>
    %11 = tpu.concatenate %8, %10 in 0 : vector<1x8x32xf32>, vector<1x8x32xf32> -> vector<2x8x32xf32>
    %12 = vector.shape_cast %5 : vector<2x8x32xf32> to vector<16x32xf32>
    %13 = arith.truncf %12 : vector<16x32xf32> to vector<16x32xbf16>
    %14 = vector.shape_cast %11 : vector<2x8x32xf32> to vector<16x32xf32>
    %15 = arith.truncf %14 : vector<16x32xf32> to vector<16x32xbf16>
    %c0_5 = arith.constant 0 : index
    %c0_6 = arith.constant 0 : index
    %16 = vector.load %arg3[%c0_5, %c0_6] : memref<32x32xbf16, #tpu.memory_space<vmem>>, vector<32x32xbf16>
    %cst = arith.constant dense<0.000000e+00> : vector<16x32xf32>
    %17 = tpu.matmul %13, %16, %cst {dimension_numbers = #tpu.dot_dimension_numbers<[1], [0], [0], [1], [0, 0, 1, 1], [], []>} : vector<16x32xbf16>, vector<32x32xbf16>, vector<16x32xf32> -> vector<16x32xf32>
    %c0_7 = arith.constant 0 : index
    %c0_8 = arith.constant 0 : index
    %18 = vector.load %arg4[%c0_7, %c0_8] : memref<1x32xf32, #tpu.memory_space<vmem>>, vector<1x32xf32>
    %19 = vector.broadcast %18 : vector<1x32xf32> to vector<16x32xf32>
    %20 = arith.addf %17, %19 : vector<16x32xf32>
    %c0_9 = arith.constant 0 : index
    %c0_10 = arith.constant 0 : index
    %21 = vector.load %arg5[%c0_9, %c0_10] : memref<32x32xbf16, #tpu.memory_space<vmem>>, vector<32x32xbf16>
    %cst_11 = arith.constant dense<0.000000e+00> : vector<16x32xf32>
    %22 = tpu.matmul %15, %21, %cst_11 {dimension_numbers = #tpu.dot_dimension_numbers<[1], [0], [0], [1], [0, 0, 1, 1], [], []>} : vector<16x32xbf16>, vector<32x32xbf16>, vector<16x32xf32> -> vector<16x32xf32>
    %c0_12 = arith.constant 0 : index
    %c0_13 = arith.constant 0 : index
    %23 = vector.load %arg6[%c0_12, %c0_13] : memref<1x32xf32, #tpu.memory_space<vmem>>, vector<1x32xf32>
    %24 = vector.broadcast %23 : vector<1x32xf32> to vector<16x32xf32>
    %25 = arith.addf %22, %24 : vector<16x32xf32>
    %c0_14 = arith.constant 0 : index
    %c0_15 = arith.constant 0 : index
    %26 = vector.load %arg7[%c0_14, %c0_15] : memref<32x32xbf16, #tpu.memory_space<vmem>>, vector<32x32xbf16>
    %cst_16 = arith.constant dense<0.000000e+00> : vector<16x32xf32>
    %27 = tpu.matmul %15, %26, %cst_16 {dimension_numbers = #tpu.dot_dimension_numbers<[1], [0], [0], [1], [0, 0, 1, 1], [], []>} : vector<16x32xbf16>, vector<32x32xbf16>, vector<16x32xf32> -> vector<16x32xf32>
    %c0_17 = arith.constant 0 : index
    %c0_18 = arith.constant 0 : index
    %28 = vector.load %arg8[%c0_17, %c0_18] : memref<1x32xf32, #tpu.memory_space<vmem>>, vector<1x32xf32>
    %29 = vector.broadcast %28 : vector<1x32xf32> to vector<16x32xf32>
    %30 = arith.addf %27, %29 : vector<16x32xf32>
    %31 = vector.extract_strided_slice %20 {offsets = [0, 0], sizes = [16, 8], strides = [1, 1]} : vector<16x32xf32> to vector<16x8xf32>
    %32 = arith.truncf %31 : vector<16x8xf32> to vector<16x8xbf16>
    %33 = vector.extract_strided_slice %20 {offsets = [0, 8], sizes = [16, 8], strides = [1, 1]} : vector<16x32xf32> to vector<16x8xf32>
    %34 = arith.truncf %33 : vector<16x8xf32> to vector<16x8xbf16>
    %35 = vector.extract_strided_slice %20 {offsets = [0, 16], sizes = [16, 8], strides = [1, 1]} : vector<16x32xf32> to vector<16x8xf32>
    %36 = arith.truncf %35 : vector<16x8xf32> to vector<16x8xbf16>
    %37 = vector.extract_strided_slice %20 {offsets = [0, 24], sizes = [16, 8], strides = [1, 1]} : vector<16x32xf32> to vector<16x8xf32>
    %38 = arith.truncf %37 : vector<16x8xf32> to vector<16x8xbf16>
    %39 = vector.shape_cast %32 : vector<16x8xbf16> to vector<1x16x8xbf16>
    %40 = vector.shape_cast %34 : vector<16x8xbf16> to vector<1x16x8xbf16>
    %41 = vector.shape_cast %36 : vector<16x8xbf16> to vector<1x16x8xbf16>
    %42 = vector.shape_cast %38 : vector<16x8xbf16> to vector<1x16x8xbf16>
    %43 = tpu.concatenate %39, %40, %41, %42 in 0 : vector<1x16x8xbf16>, vector<1x16x8xbf16>, vector<1x16x8xbf16>, vector<1x16x8xbf16> -> vector<4x16x8xbf16>
    %44 = vector.shape_cast %43 : vector<4x16x8xbf16> to vector<8x8x8xbf16>
    %45 = vector.extract_strided_slice %25 {offsets = [0, 0], sizes = [16, 8], strides = [1, 1]} : vector<16x32xf32> to vector<16x8xf32>
    %46 = arith.truncf %45 : vector<16x8xf32> to vector<16x8xbf16>
    %47 = vector.extract_strided_slice %25 {offsets = [0, 8], sizes = [16, 8], strides = [1, 1]} : vector<16x32xf32> to vector<16x8xf32>
    %48 = arith.truncf %47 : vector<16x8xf32> to vector<16x8xbf16>
    %49 = vector.extract_strided_slice %25 {offsets = [0, 16], sizes = [16, 8], strides = [1, 1]} : vector<16x32xf32> to vector<16x8xf32>
    %50 = arith.truncf %49 : vector<16x8xf32> to vector<16x8xbf16>
    %51 = vector.extract_strided_slice %25 {offsets = [0, 24], sizes = [16, 8], strides = [1, 1]} : vector<16x32xf32> to vector<16x8xf32>
    %52 = arith.truncf %51 : vector<16x8xf32> to vector<16x8xbf16>
    %53 = vector.shape_cast %46 : vector<16x8xbf16> to vector<1x16x8xbf16>
    %54 = vector.shape_cast %48 : vector<16x8xbf16> to vector<1x16x8xbf16>
    %55 = vector.shape_cast %50 : vector<16x8xbf16> to vector<1x16x8xbf16>
    %56 = vector.shape_cast %52 : vector<16x8xbf16> to vector<1x16x8xbf16>
    %57 = tpu.concatenate %53, %54, %55, %56 in 0 : vector<1x16x8xbf16>, vector<1x16x8xbf16>, vector<1x16x8xbf16>, vector<1x16x8xbf16> -> vector<4x16x8xbf16>
    %58 = vector.shape_cast %57 : vector<4x16x8xbf16> to vector<8x8x8xbf16>
    %59 = vector.extract_strided_slice %30 {offsets = [0, 0], sizes = [16, 8], strides = [1, 1]} : vector<16x32xf32> to vector<16x8xf32>
    %60 = arith.truncf %59 : vector<16x8xf32> to vector<16x8xbf16>
    %61 = vector.extract_strided_slice %30 {offsets = [0, 8], sizes = [16, 8], strides = [1, 1]} : vector<16x32xf32> to vector<16x8xf32>
    %62 = arith.truncf %61 : vector<16x8xf32> to vector<16x8xbf16>
    %63 = vector.extract_strided_slice %30 {offsets = [0, 16], sizes = [16, 8], strides = [1, 1]} : vector<16x32xf32> to vector<16x8xf32>
    %64 = arith.truncf %63 : vector<16x8xf32> to vector<16x8xbf16>
    %65 = vector.extract_strided_slice %30 {offsets = [0, 24], sizes = [16, 8], strides = [1, 1]} : vector<16x32xf32> to vector<16x8xf32>
    %66 = arith.truncf %65 : vector<16x8xf32> to vector<16x8xbf16>
    %67 = vector.shape_cast %60 : vector<16x8xbf16> to vector<1x16x8xbf16>
    %68 = vector.shape_cast %62 : vector<16x8xbf16> to vector<1x16x8xbf16>
    %69 = vector.shape_cast %64 : vector<16x8xbf16> to vector<1x16x8xbf16>
    %70 = vector.shape_cast %66 : vector<16x8xbf16> to vector<1x16x8xbf16>
    %71 = tpu.concatenate %67, %68, %69, %70 in 0 : vector<1x16x8xbf16>, vector<1x16x8xbf16>, vector<1x16x8xbf16>, vector<1x16x8xbf16> -> vector<4x16x8xbf16>
    %72 = vector.shape_cast %71 : vector<4x16x8xbf16> to vector<8x8x8xbf16>
    "tpu.trace_start"() <{level = 10 : i32, message = "gqd,gkd->gqk"}> : () -> ()
    %cst_19 = arith.constant dense<0.000000e+00> : vector<8x8x8xf32>
    %73 = tpu.matmul %44, %58, %cst_19 {dimension_numbers = #tpu.dot_dimension_numbers<[2], [2], [1], [1], [0, 0, 0, 1, 1, 1], [0], [0]>} : vector<8x8x8xbf16>, vector<8x8x8xbf16>, vector<8x8x8xf32> -> vector<8x8x8xf32>
    "tpu.trace_stop"() : () -> ()
    %cst_20 = arith.constant dense<0xFF800000> : vector<8x8xf32>
    %74 = vector.multi_reduction <maximumf>, %73, %cst_20 [2] : vector<8x8x8xf32> to vector<8x8xf32>
    %75 = vector.shape_cast %74 : vector<8x8xf32> to vector<8x8x1xf32>
    %76 = vector.broadcast %75 : vector<8x8x1xf32> to vector<8x8x8xf32>
    %77 = arith.subf %73, %76 : vector<8x8x8xf32>
    %78 = math.exp %77 : vector<8x8x8xf32>
    %cst_21 = arith.constant dense<0.000000e+00> : vector<8x8xf32>
    %79 = vector.multi_reduction <add>, %78, %cst_21 [2] : vector<8x8x8xf32> to vector<8x8xf32>
    %80 = vector.shape_cast %79 : vector<8x8xf32> to vector<8x8x1xf32>
    %81 = tpu.reciprocal %80 {approx = true} : vector<8x8x1xf32> -> vector<8x8x1xf32>
    %82 = vector.broadcast %81 : vector<8x8x1xf32> to vector<8x8x8xf32>
    %83 = arith.mulf %78, %82 : vector<8x8x8xf32>
    %84 = arith.truncf %83 : vector<8x8x8xf32> to vector<8x8x8xbf16>
    "tpu.trace_start"() <{level = 10 : i32, message = "gqk,gkd->gqd"}> : () -> ()
    %cst_22 = arith.constant dense<0.000000e+00> : vector<8x8x8xf32>
    %85 = tpu.matmul %84, %72, %cst_22 {dimension_numbers = #tpu.dot_dimension_numbers<[2], [1], [1], [2], [0, 0, 0, 1, 1, 2], [0], [0]>} : vector<8x8x8xbf16>, vector<8x8x8xbf16>, vector<8x8x8xf32> -> vector<8x8x8xf32>
    "tpu.trace_stop"() : () -> ()
    %86 = arith.truncf %85 : vector<8x8x8xf32> to vector<8x8x8xbf16>
    %87 = vector.shape_cast %86 : vector<8x8x8xbf16> to vector<4x2x8x8xbf16>
    %88 = vector.extract_strided_slice %87 {offsets = [0, 0, 0, 0], sizes = [1, 2, 8, 8], strides = [1, 1, 1, 1]} : vector<4x2x8x8xbf16> to vector<1x2x8x8xbf16>
    %89 = vector.shape_cast %88 : vector<1x2x8x8xbf16> to vector<2x8x8xbf16>
    %90 = vector.shape_cast %89 : vector<2x8x8xbf16> to vector<16x8xbf16>
    %91 = vector.extract_strided_slice %87 {offsets = [1, 0, 0, 0], sizes = [1, 2, 8, 8], strides = [1, 1, 1, 1]} : vector<4x2x8x8xbf16> to vector<1x2x8x8xbf16>
    %92 = vector.shape_cast %91 : vector<1x2x8x8xbf16> to vector<2x8x8xbf16>
    %93 = vector.shape_cast %92 : vector<2x8x8xbf16> to vector<16x8xbf16>
    %94 = vector.extract_strided_slice %87 {offsets = [2, 0, 0, 0], sizes = [1, 2, 8, 8], strides = [1, 1, 1, 1]} : vector<4x2x8x8xbf16> to vector<1x2x8x8xbf16>
    %95 = vector.shape_cast %94 : vector<1x2x8x8xbf16> to vector<2x8x8xbf16>
    %96 = vector.shape_cast %95 : vector<2x8x8xbf16> to vector<16x8xbf16>
    %97 = vector.extract_strided_slice %87 {offsets = [3, 0, 0, 0], sizes = [1, 2, 8, 8], strides = [1, 1, 1, 1]} : vector<4x2x8x8xbf16> to vector<1x2x8x8xbf16>
    %98 = vector.shape_cast %97 : vector<1x2x8x8xbf16> to vector<2x8x8xbf16>
    %99 = vector.shape_cast %98 : vector<2x8x8xbf16> to vector<16x8xbf16>
    %100 = tpu.concatenate %90, %93, %96, %99 in 1 : vector<16x8xbf16>, vector<16x8xbf16>, vector<16x8xbf16>, vector<16x8xbf16> -> vector<16x32xbf16>
    %c0_23 = arith.constant 0 : index
    %c0_24 = arith.constant 0 : index
    %101 = vector.load %arg9[%c0_23, %c0_24] : memref<32x32xbf16, #tpu.memory_space<vmem>>, vector<32x32xbf16>
    %cst_25 = arith.constant dense<0.000000e+00> : vector<16x32xf32>
    %102 = tpu.matmul %100, %101, %cst_25 {dimension_numbers = #tpu.dot_dimension_numbers<[1], [0], [0], [1], [0, 0, 1, 1], [], []>} : vector<16x32xbf16>, vector<32x32xbf16>, vector<16x32xf32> -> vector<16x32xf32>
    %c0_26 = arith.constant 0 : index
    %c0_27 = arith.constant 0 : index
    %103 = vector.load %arg10[%c0_26, %c0_27] : memref<1x32xf32, #tpu.memory_space<vmem>>, vector<1x32xf32>
    %104 = vector.broadcast %103 : vector<1x32xf32> to vector<16x32xf32>
    %105 = arith.addf %102, %104 : vector<16x32xf32>
    %106 = arith.addf %12, %105 : vector<16x32xf32>
    %c0_28 = arith.constant 0 : index
    %c0_29 = arith.constant 0 : index
    %107 = vector.load %arg11[%c0_28, %c0_29] : memref<1x32xf32, #tpu.memory_space<vmem>>, vector<1x32xf32>
    %c0_30 = arith.constant 0 : index
    %c0_31 = arith.constant 0 : index
    %108 = vector.load %arg12[%c0_30, %c0_31] : memref<1x32xf32, #tpu.memory_space<vmem>>, vector<1x32xf32>
    %cst_32 = arith.constant dense<0.000000e+00> : vector<16xf32>
    %109 = vector.multi_reduction <add>, %106, %cst_32 [1] : vector<16x32xf32> to vector<16xf32>
    %110 = vector.shape_cast %109 : vector<16xf32> to vector<16x1xf32>
    %cst_33 = arith.constant 3.200000e+01 : f32
    %111 = vector.broadcast %cst_33 : f32 to vector<16x1xf32>
    %112 = arith.divf %110, %111 : vector<16x1xf32>
    %113 = vector.broadcast %112 : vector<16x1xf32> to vector<16x32xf32>
    %114 = arith.subf %106, %113 : vector<16x32xf32>
    %115 = arith.mulf %114, %114 : vector<16x32xf32>
    %cst_34 = arith.constant dense<0.000000e+00> : vector<16xf32>
    %116 = vector.multi_reduction <add>, %115, %cst_34 [1] : vector<16x32xf32> to vector<16xf32>
    %117 = vector.shape_cast %116 : vector<16xf32> to vector<16x1xf32>
    %cst_35 = arith.constant 3.200000e+01 : f32
    %118 = vector.broadcast %cst_35 : f32 to vector<16x1xf32>
    %119 = arith.divf %117, %118 : vector<16x1xf32>
    %120 = vector.broadcast %112 : vector<16x1xf32> to vector<16x32xf32>
    %121 = arith.subf %106, %120 : vector<16x32xf32>
    %cst_36 = arith.constant 9.99999974E-6 : f32
    %122 = vector.broadcast %cst_36 : f32 to vector<16x1xf32>
    %123 = arith.addf %119, %122 : vector<16x1xf32>
    %124 = math.rsqrt %123 : vector<16x1xf32>
    %125 = vector.broadcast %124 : vector<16x1xf32> to vector<16x32xf32>
    %126 = arith.mulf %121, %125 : vector<16x32xf32>
    %127 = vector.broadcast %107 : vector<1x32xf32> to vector<16x32xf32>
    %128 = arith.mulf %126, %127 : vector<16x32xf32>
    %129 = vector.broadcast %108 : vector<1x32xf32> to vector<16x32xf32>
    %130 = arith.addf %128, %129 : vector<16x32xf32>
    %131 = arith.truncf %130 : vector<16x32xf32> to vector<16x32xbf16>
    %c0_37 = arith.constant 0 : index
    %c0_38 = arith.constant 0 : index
    %132 = vector.load %arg13[%c0_37, %c0_38] : memref<32x64xbf16, #tpu.memory_space<vmem>>, vector<32x64xbf16>
    %cst_39 = arith.constant dense<0.000000e+00> : vector<16x64xf32>
    %133 = tpu.matmul %131, %132, %cst_39 {dimension_numbers = #tpu.dot_dimension_numbers<[1], [0], [0], [1], [0, 0, 1, 1], [], []>} : vector<16x32xbf16>, vector<32x64xbf16>, vector<16x64xf32> -> vector<16x64xf32>
    %c0_40 = arith.constant 0 : index
    %c0_41 = arith.constant 0 : index
    %134 = vector.load %arg14[%c0_40, %c0_41] : memref<1x64xf32, #tpu.memory_space<vmem>>, vector<1x64xf32>
    %135 = vector.broadcast %134 : vector<1x64xf32> to vector<16x64xf32>
    %136 = arith.addf %133, %135 : vector<16x64xf32>
    %cst_42 = arith.constant 0.000000e+00 : f32
    %137 = vector.broadcast %cst_42 : f32 to vector<16x64xf32>
    %138 = arith.maximumf %136, %137 : vector<16x64xf32>
    %139 = arith.truncf %138 : vector<16x64xf32> to vector<16x64xbf16>
    %c0_43 = arith.constant 0 : index
    %c0_44 = arith.constant 0 : index
    %140 = vector.load %arg15[%c0_43, %c0_44] : memref<64x32xbf16, #tpu.memory_space<vmem>>, vector<64x32xbf16>
    %cst_45 = arith.constant dense<0.000000e+00> : vector<16x32xf32>
    %141 = tpu.matmul %139, %140, %cst_45 {dimension_numbers = #tpu.dot_dimension_numbers<[1], [0], [0], [1], [0, 0, 1, 1], [], []>} : vector<16x64xbf16>, vector<64x32xbf16>, vector<16x32xf32> -> vector<16x32xf32>
    %c0_46 = arith.constant 0 : index
    %c0_47 = arith.constant 0 : index
    %142 = vector.load %arg16[%c0_46, %c0_47] : memref<1x32xf32, #tpu.memory_space<vmem>>, vector<1x32xf32>
    %143 = vector.broadcast %142 : vector<1x32xf32> to vector<16x32xf32>
    %144 = arith.addf %141, %143 : vector<16x32xf32>
    %145 = arith.addf %130, %144 : vector<16x32xf32>
    %c0_48 = arith.constant 0 : index
    %c0_49 = arith.constant 0 : index
    %146 = vector.load %arg17[%c0_48, %c0_49] : memref<1x32xf32, #tpu.memory_space<vmem>>, vector<1x32xf32>
    %c0_50 = arith.constant 0 : index
    %c0_51 = arith.constant 0 : index
    %147 = vector.load %arg18[%c0_50, %c0_51] : memref<1x32xf32, #tpu.memory_space<vmem>>, vector<1x32xf32>
    %cst_52 = arith.constant dense<0.000000e+00> : vector<16xf32>
    %148 = vector.multi_reduction <add>, %145, %cst_52 [1] : vector<16x32xf32> to vector<16xf32>
    %149 = vector.shape_cast %148 : vector<16xf32> to vector<16x1xf32>
    %cst_53 = arith.constant 3.200000e+01 : f32
    %150 = vector.broadcast %cst_53 : f32 to vector<16x1xf32>
    %151 = arith.divf %149, %150 : vector<16x1xf32>
    %152 = vector.broadcast %151 : vector<16x1xf32> to vector<16x32xf32>
    %153 = arith.subf %145, %152 : vector<16x32xf32>
    %154 = arith.mulf %153, %153 : vector<16x32xf32>
    %cst_54 = arith.constant dense<0.000000e+00> : vector<16xf32>
    %155 = vector.multi_reduction <add>, %154, %cst_54 [1] : vector<16x32xf32> to vector<16xf32>
    %156 = vector.shape_cast %155 : vector<16xf32> to vector<16x1xf32>
    %cst_55 = arith.constant 3.200000e+01 : f32
    %157 = vector.broadcast %cst_55 : f32 to vector<16x1xf32>
    %158 = arith.divf %156, %157 : vector<16x1xf32>
    %159 = vector.broadcast %151 : vector<16x1xf32> to vector<16x32xf32>
    %160 = arith.subf %145, %159 : vector<16x32xf32>
    %cst_56 = arith.constant 9.99999974E-6 : f32
    %161 = vector.broadcast %cst_56 : f32 to vector<16x1xf32>
    %162 = arith.addf %158, %161 : vector<16x1xf32>
    %163 = math.rsqrt %162 : vector<16x1xf32>
    %164 = vector.broadcast %163 : vector<16x1xf32> to vector<16x32xf32>
    %165 = arith.mulf %160, %164 : vector<16x32xf32>
    %166 = vector.broadcast %146 : vector<1x32xf32> to vector<16x32xf32>
    %167 = arith.mulf %165, %166 : vector<16x32xf32>
    %168 = vector.broadcast %147 : vector<1x32xf32> to vector<16x32xf32>
    %169 = arith.addf %167, %168 : vector<16x32xf32>
    %170 = vector.shape_cast %169 : vector<16x32xf32> to vector<2x8x32xf32>
    %171 = vector.extract_strided_slice %170 {offsets = [0, 0, 0], sizes = [1, 8, 32], strides = [1, 1, 1]} : vector<2x8x32xf32> to vector<1x8x32xf32>
    %172 = vector.shape_cast %171 : vector<1x8x32xf32> to vector<8x1x32xf32>
    %173 = vector.extract_strided_slice %170 {offsets = [1, 0, 0], sizes = [1, 8, 32], strides = [1, 1, 1]} : vector<2x8x32xf32> to vector<1x8x32xf32>
    %174 = vector.shape_cast %173 : vector<1x8x32xf32> to vector<8x1x32xf32>
    %175 = tpu.concatenate %172, %174 in 1 : vector<8x1x32xf32>, vector<8x1x32xf32> -> vector<8x2x32xf32>
    %c0_57 = arith.constant 0 : index
    %c0_58 = arith.constant 0 : index
    %c0_59 = arith.constant 0 : index
    %176 = vector.load %arg19[%c0_57, %c0_58, %c0_59] : memref<8x2x32xf32, #tpu.memory_space<vmem>>, vector<8x2x32xf32>
    tpu.vector_store %arg19[%c0_57, %c0_58, %c0_59], %175 {strides = array<i32>} : memref<8x2x32xf32, #tpu.memory_space<vmem>>, vector<8x2x32xf32>,
    return
  }
  func.func @transform_0(%arg0: i32) -> (i32, i32, i32) {
    %c0_i32 = arith.constant 0 : i32
    %c0_i32_0 = arith.constant 0 : i32
    %c0_i32_1 = arith.constant 0 : i32
    return %c0_i32, %arg0, %c0_i32_0 : i32, i32, i32
  }
  func.func @transform_1(%arg0: i32) -> (i32, i32, i32) {
    %c0_i32 = arith.constant 0 : i32
    %c0_i32_0 = arith.constant 0 : i32
    %c0_i32_1 = arith.constant 0 : i32
    return %c0_i32, %arg0, %c0_i32_0 : i32, i32, i32
  }
  func.func @transform_2(%arg0: i32) -> (i32, i32) {
    %c0_i32 = arith.constant 0 : i32
    %c0_i32_0 = arith.constant 0 : i32
    %c0_i32_1 = arith.constant 0 : i32
    return %c0_i32, %c0_i32_0 : i32, i32
  }
  func.func @transform_3(%arg0: i32) -> (i32, i32) {
    %c0_i32 = arith.constant 0 : i32
    %c0_i32_0 = arith.constant 0 : i32
    %c0_i32_1 = arith.constant 0 : i32
    return %c0_i32, %c0_i32_0 : i32, i32
  }
  func.func @transform_4(%arg0: i32) -> (i32, i32) {
    %c0_i32 = arith.constant 0 : i32
    %c0_i32_0 = arith.constant 0 : i32
    %c0_i32_1 = arith.constant 0 : i32
    return %c0_i32, %c0_i32_0 : i32, i32
  }
  func.func @transform_5(%arg0: i32) -> (i32, i32) {
    %c0_i32 = arith.constant 0 : i32
    %c0_i32_0 = arith.constant 0 : i32
    %c0_i32_1 = arith.constant 0 : i32
    return %c0_i32, %c0_i32_0 : i32, i32
  }
  func.func @transform_6(%arg0: i32) -> (i32, i32) {
    %c0_i32 = arith.constant 0 : i32
    %c0_i32_0 = arith.constant 0 : i32
    %c0_i32_1 = arith.constant 0 : i32
    return %c0_i32, %c0_i32_0 : i32, i32
  }
  func.func @transform_7(%arg0: i32) -> (i32, i32) {
    %c0_i32 = arith.constant 0 : i32
    %c0_i32_0 = arith.constant 0 : i32
    %c0_i32_1 = arith.constant 0 : i32
    return %c0_i32, %c0_i32_0 : i32, i32
  }
  func.func @transform_8(%arg0: i32) -> (i32, i32) {
    %c0_i32 = arith.constant 0 : i32
    %c0_i32_0 = arith.constant 0 : i32
    %c0_i32_1 = arith.constant 0 : i32
    return %c0_i32, %c0_i32_0 : i32, i32
  }
  func.func @transform_9(%arg0: i32) -> (i32, i32) {
    %c0_i32 = arith.constant 0 : i32
    %c0_i32_0 = arith.constant 0 : i32
    %c0_i32_1 = arith.constant 0 : i32
    return %c0_i32, %c0_i32_0 : i32, i32
  }
  func.func @transform_10(%arg0: i32) -> (i32, i32) {
    %c0_i32 = arith.constant 0 : i32
    %c0_i32_0 = arith.constant 0 : i32
    %c0_i32_1 = arith.constant 0 : i32
    return %c0_i32, %c0_i32_0 : i32, i32
  }
  func.func @transform_11(%arg0: i32) -> (i32, i32) {
    %c0_i32 = arith.constant 0 : i32
    %c0_i32_0 = arith.constant 0 : i32
    %c0_i32_1 = arith.constant 0 : i32
    return %c0_i32, %c0_i32_0 : i32, i32
  }
  func.func @transform_12(%arg0: i32) -> (i32, i32) {
    %c0_i32 = arith.constant 0 : i32
    %c0_i32_0 = arith.constant 0 : i32
    %c0_i32_1 = arith.constant 0 : i32
    return %c0_i32, %c0_i32_0 : i32, i32
  }
  func.func @transform_13(%arg0: i32) -> (i32, i32) {
    %c0_i32 = arith.constant 0 : i32
    %c0_i32_0 = arith.constant 0 : i32
    %c0_i32_1 = arith.constant 0 : i32
    return %c0_i32, %c0_i32_0 : i32, i32
  }
  func.func @transform_14(%arg0: i32) -> (i32, i32) {
    %c0_i32 = arith.constant 0 : i32
    %c0_i32_0 = arith.constant 0 : i32
    %c0_i32_1 = arith.constant 0 : i32
    return %c0_i32, %c0_i32_0 : i32, i32
  }
  func.func @transform_15(%arg0: i32) -> (i32, i32) {
    %c0_i32 = arith.constant 0 : i32
    %c0_i32_0 = arith.constant 0 : i32
    %c0_i32_1 = arith.constant 0 : i32
    return %c0_i32, %c0_i32_0 : i32, i32
  }
  func.func @transform_16(%arg0: i32) -> (i32, i32) {
    %c0_i32 = arith.constant 0 : i32
    %c0_i32_0 = arith.constant 0 : i32
    %c0_i32_1 = arith.constant 0 : i32
    return %c0_i32, %c0_i32_0 : i32, i32
  }
  func.func @transform_17(%arg0: i32) -> (i32, i32) {
    %c0_i32 = arith.constant 0 : i32
    %c0_i32_0 = arith.constant 0 : i32
    %c0_i32_1 = arith.constant 0 : i32
    return %c0_i32, %c0_i32_0 : i32, i32
  }
  func.func @transform_18(%arg0: i32) -> (i32, i32, i32) {
    %c0_i32 = arith.constant 0 : i32
    %c0_i32_0 = arith.constant 0 : i32
    %c0_i32_1 = arith.constant 0 : i32
    return %c0_i32, %arg0, %c0_i32_0 : i32, i32, i32
  }
}

</mosaic_0001>

<llo_original>
// kernel: tpu_custom_call.1
$region0: #{tpu_custom_call.1}
  #allocation0 [shape = 'u32[]', space=smem, size = 0x4, offset = 0x4, fixed_abs, tag = 'smem constant byte address 0x4 - core index']
  #allocation1 [shape = 'u32[144,128]{1,0:T(1,128)}', space=vmem, size = 0x12000, scoped, tag = 'internal scratch']
  %s0 = inlined_call_operand.vmem [shape: f32[8,2,32], index: 0, kind: input, shape index: {}]
  %s1 = inlined_call_operand.vmem [shape: f32[8,2,32], index: 1, kind: input, shape index: {}]
  %s2 = inlined_call_operand.vmem [shape: bf16[32,32], index: 2, kind: input, shape index: {}]
  %s3 = inlined_call_operand.hbm [shape: f32[1,32], index: 3, kind: input, shape index: {}]
  %s4 = inlined_call_operand.hbm [shape: bf16[32,32], index: 4, kind: input, shape index: {}]
  %s5 = inlined_call_operand.hbm [shape: f32[1,32], index: 5, kind: input, shape index: {}]
  %s6 = inlined_call_operand.hbm [shape: bf16[32,32], index: 6, kind: input, shape index: {}]
  %s7 = inlined_call_operand.hbm [shape: f32[1,32], index: 7, kind: input, shape index: {}]
  %s8 = inlined_call_operand.hbm [shape: bf16[32,32], index: 8, kind: input, shape index: {}]
  %s9 = inlined_call_operand.hbm [shape: f32[1,32], index: 9, kind: input, shape index: {}]
  %s10 = inlined_call_operand.vmem [shape: f32[1,32], index: 10, kind: input, shape index: {}]
  %s11 = inlined_call_operand.vmem [shape: f32[1,32], index: 11, kind: input, shape index: {}]
  %s12 = inlined_call_operand.vmem [shape: bf16[32,64], index: 12, kind: input, shape index: {}]
  %s13 = inlined_call_operand.vmem [shape: f32[1,64], index: 13, kind: input, shape index: {}]
  %s14 = inlined_call_operand.vmem [shape: bf16[64,32], index: 14, kind: input, shape index: {}]
  %s15 = inlined_call_operand.vmem [shape: f32[1,32], index: 15, kind: input, shape index: {}]
  %s16 = inlined_call_operand.vmem [shape: f32[1,32], index: 16, kind: input, shape index: {}]
  %s17 = inlined_call_operand.vmem [shape: f32[1,32], index: 17, kind: input, shape index: {}]
  %s18 = inlined_call_operand.hbm [shape: f32[8,2,32], index: 18, kind: output, shape index: {}]
  %s19 = sld [smem:[#allocation0]]
  $region110: #{tpu_custom_call.1} parent=0
    _
  %s21 = ssub.s32 1, %s19
  %s22 = scalar_select 0, %s21, %s19
  $region1: #{tpu_custom_call.1} parent=0
    #allocation2 [shape = 'u8[512]{0}', space=vmem, size = 0x400, scoped, tag = 'input window, operand 3, single buffered']
    #allocation3 [shape = 's32[1]{0}', space=sflag, size = 0x4, scoped, tag = 'scoped memory for tpu_custom_call.1']
    #allocation4 [shape = 's32[1]{0}', space=sflag, size = 0x4, scoped, tag = 'scoped memory for tpu_custom_call.1']
    #allocation5 [shape = 'u8[8192]{0}', space=vmem, size = 0x2000, scoped, tag = 'input window, operand 4, single buffered']
    #allocation6 [shape = 's32[1]{0}', space=sflag, size = 0x4, scoped, tag = 'scoped memory for tpu_custom_call.1']
    #allocation7 [shape = 'u8[512]{0}', space=vmem, size = 0x400, scoped, tag = 'input window, operand 5, single buffered']
    #allocation8 [shape = 'u8[8192]{0}', space=vmem, size = 0x2000, scoped, tag = 'input window, operand 6, single buffered']
    #allocation9 [shape = 's32[1]{0}', space=sflag, size = 0x4, scoped, tag = 'scoped memory for tpu_custom_call.1']
    #allocation10 [shape = 'u8[512]{0}', space=vmem, size = 0x400, scoped, tag = 'input window, operand 7, single buffered']
    #allocation11 [shape = 'u8[8192]{0}', space=vmem, size = 0x2000, scoped, tag = 'input window, operand 8, single buffered']
    #allocation12 [shape = 's32[1]{0}', space=sflag, size = 0x4, scoped, tag = 'scoped memory for tpu_custom_call.1']
    #allocation13 [shape = 'u8[512]{0}', space=vmem, size = 0x400, scoped, tag = 'input window, operand 9, single buffered']
    #allocation14 [shape = 'u8[8192]{0}', space=vmem, size = 0x2000, scoped, tag = 'output window, operand 0, single buffered']
    %23 = vsyncpa [#allocation3], 0
    %24 = vsyncpa [#allocation6], 0
    %25 = vsyncpa [#allocation9], 0
    %26 = vsyncpa [#allocation12], 0
    %27 = vsyncpa [#allocation4], 0
    // Predicated region
    $region2: #{tpu_custom_call.1} parent=1 // pred_check
      _
    $region3: #{tpu_custom_call.1} parent=1 // pred_check_branch
      %29 = sbr.rel (0) target = $region5
    $region4: #{tpu_custom_call.1} parent=1 // pred_region
      _
    $region5: #{tpu_custom_call.1} parent=1 // pred_fallthru
      _
    // Predicated region
    $region6: #{tpu_custom_call.1} parent=1 // pred_check
      _
    $region7: #{tpu_custom_call.1} parent=1 // pred_check_branch
      %31 = sbr.rel (0) target = $region9
    $region8: #{tpu_custom_call.1} parent=1 // pred_region
      _
    $region9: #{tpu_custom_call.1} parent=1 // pred_fallthru
      _
    // Predicated region
    $region10: #{tpu_custom_call.1} parent=1 // pred_check
      _
    $region11: #{tpu_custom_call.1} parent=1 // pred_check_branch
      %33 = sbr.rel (0) target = $region13
    $region12: #{tpu_custom_call.1} parent=1 // pred_region
      _
    $region13: #{tpu_custom_call.1} parent=1 // pred_fallthru
      _
    // Predicated region
    $region14: #{tpu_custom_call.1} parent=1 // pred_check
      _
    $region15: #{tpu_custom_call.1} parent=1 // pred_check_branch
      %35 = sbr.rel (0) target = $region17
    $region16: #{tpu_custom_call.1} parent=1 // pred_region
      %s37 = ssub.s32 16, 16
      %38 = vsyncadd [#allocation3], %s37
      %s40 = sshll.u32 [#allocation2], 4
      %s41 = int_to_ptr.vmem [resolvable:$true] %s40
      %43 = dma.hbm_to_vmem [thread:$0]  %s3, 16, %s41, [#allocation3]
    $region17: #{tpu_custom_call.1} parent=1 // pred_fallthru
      _
    // Predicated region
    $region18: #{tpu_custom_call.1} parent=1 // pred_check
      _
    $region19: #{tpu_custom_call.1} parent=1 // pred_check_branch
      %45 = sbr.rel (0) target = $region21
    $region20: #{tpu_custom_call.1} parent=1 // pred_region
      %s47 = ssub.s32 256, 256
      %48 = vsyncadd [#allocation6], %s47
      %s49 = sshll.u32 [#allocation5], 4
      %s50 = int_to_ptr.vmem [resolvable:$true] %s49
      %55 = dma.hbm_to_vmem [thread:$0]  %s4, 256, %s50, [#allocation6], 64, 64, 4
    $region21: #{tpu_custom_call.1} parent=1 // pred_fallthru
      _
    // Predicated region
    $region22: #{tpu_custom_call.1} parent=1 // pred_check
      _
    $region23: #{tpu_custom_call.1} parent=1 // pred_check_branch
      %57 = sbr.rel (0) target = $region25
    $region24: #{tpu_custom_call.1} parent=1 // pred_region
      %s59 = ssub.s32 16, 16
      %60 = vsyncadd [#allocation6], %s59
      %s62 = sshll.u32 [#allocation7], 4
      %s63 = int_to_ptr.vmem [resolvable:$true] %s62
      %65 = dma.hbm_to_vmem [thread:$0]  %s5, 16, %s63, [#allocation6]
    $region25: #{tpu_custom_call.1} parent=1 // pred_fallthru
      _
    // Predicated region
    $region26: #{tpu_custom_call.1} parent=1 // pred_check
      _
    $region27: #{tpu_custom_call.1} parent=1 // pred_check_branch
      %67 = sbr.rel (0) target = $region29
    $region28: #{tpu_custom_call.1} parent=1 // pred_region
      %s69 = ssub.s32 256, 256
      %70 = vsyncadd [#allocation9], %s69
      %s71 = sshll.u32 [#allocation8], 4
      %s72 = int_to_ptr.vmem [resolvable:$true] %s71
      %77 = dma.hbm_to_vmem [thread:$0]  %s6, 256, %s72, [#allocation9], 64, 64, 4
    $region29: #{tpu_custom_call.1} parent=1 // pred_fallthru
      _
    // Predicated region
    $region30: #{tpu_custom_call.1} parent=1 // pred_check
      _
    $region31: #{tpu_custom_call.1} parent=1 // pred_check_branch
      %79 = sbr.rel (0) target = $region33
    $region32: #{tpu_custom_call.1} parent=1 // pred_region
      %s81 = ssub.s32 16, 16
      %82 = vsyncadd [#allocation9], %s81
      %s84 = sshll.u32 [#allocation10], 4
      %s85 = int_to_ptr.vmem [resolvable:$true] %s84
      %87 = dma.hbm_to_vmem [thread:$0]  %s7, 16, %s85, [#allocation9]
    $region33: #{tpu_custom_call.1} parent=1 // pred_fallthru
      _
    // Predicated region
    $region34: #{tpu_custom_call.1} parent=1 // pred_check
      _
    $region35: #{tpu_custom_call.1} parent=1 // pred_check_branch
      %89 = sbr.rel (0) target = $region37
    $region36: #{tpu_custom_call.1} parent=1 // pred_region
      %s91 = ssub.s32 256, 256
      %92 = vsyncadd [#allocation12], %s91
      %s93 = sshll.u32 [#allocation11], 4
      %s94 = int_to_ptr.vmem [resolvable:$true] %s93
      %99 = dma.hbm_to_vmem [thread:$0]  %s8, 256, %s94, [#allocation12], 64, 64, 4
    $region37: #{tpu_custom_call.1} parent=1 // pred_fallthru
      _
    // Predicated region
    $region38: #{tpu_custom_call.1} parent=1 // pred_check
      _
    $region39: #{tpu_custom_call.1} parent=1 // pred_check_branch
      %101 = sbr.rel (0) target = $region41
    $region40: #{tpu_custom_call.1} parent=1 // pred_region
      %s103 = ssub.s32 16, 16
      %104 = vsyncadd [#allocation12], %s103
      %s106 = sshll.u32 [#allocation13], 4
      %s107 = int_to_ptr.vmem [resolvable:$true] %s106
      %109 = dma.hbm_to_vmem [thread:$0]  %s9, 16, %s107, [#allocation12]
    $region41: #{tpu_custom_call.1} parent=1 // pred_fallthru
      _
    // Predicated region
    $region42: #{tpu_custom_call.1} parent=1 // pred_check
      _
    $region43: #{tpu_custom_call.1} parent=1 // pred_check_branch
      %111 = sbr.rel (0) target = $region45
    $region44: #{tpu_custom_call.1} parent=1 // pred_region
      _
    $region45: #{tpu_custom_call.1} parent=1 // pred_fallthru
      _
    // Predicated region
    $region46: #{tpu_custom_call.1} parent=1 // pred_check
      _
    $region47: #{tpu_custom_call.1} parent=1 // pred_check_branch
      %113 = sbr.rel (0) target = $region49
    $region48: #{tpu_custom_call.1} parent=1 // pred_region
      _
    $region49: #{tpu_custom_call.1} parent=1 // pred_fallthru
      _
    // Predicated region
    $region50: #{tpu_custom_call.1} parent=1 // pred_check
      _
    $region51: #{tpu_custom_call.1} parent=1 // pred_check_branch
      %115 = sbr.rel (0) target = $region53
    $region52: #{tpu_custom_call.1} parent=1 // pred_region
      _
    $region53: #{tpu_custom_call.1} parent=1 // pred_fallthru
      _
    // Predicated region
    $region54: #{tpu_custom_call.1} parent=1 // pred_check
      _
    $region55: #{tpu_custom_call.1} parent=1 // pred_check_branch
      %117 = sbr.rel (0) target = $region57
    $region56: #{tpu_custom_call.1} parent=1 // pred_region
      _
    $region57: #{tpu_custom_call.1} parent=1 // pred_fallthru
      _
    // Predicated region
    $region58: #{tpu_custom_call.1} parent=1 // pred_check
      _
    $region59: #{tpu_custom_call.1} parent=1 // pred_check_branch
      %119 = sbr.rel (0) target = $region61
    $region60: #{tpu_custom_call.1} parent=1 // pred_region
      _
    $region61: #{tpu_custom_call.1} parent=1 // pred_fallthru
      _
    // Predicated region
    $region62: #{tpu_custom_call.1} parent=1 // pred_check
      _
    $region63: #{tpu_custom_call.1} parent=1 // pred_check_branch
      %121 = sbr.rel (0) target = $region65
    $region64: #{tpu_custom_call.1} parent=1 // pred_region
      _
    $region65: #{tpu_custom_call.1} parent=1 // pred_fallthru
      _
    // Predicated region
    $region66: #{tpu_custom_call.1} parent=1 // pred_check
      _
    $region67: #{tpu_custom_call.1} parent=1 // pred_check_branch
      %123 = sbr.rel (0) target = $region69
    $region68: #{tpu_custom_call.1} parent=1 // pred_region
      _
    $region69: #{tpu_custom_call.1} parent=1 // pred_fallthru
      _
    // Predicated region
    $region70: #{tpu_custom_call.1} parent=1 // pred_check
      _
    $region71: #{tpu_custom_call.1} parent=1 // pred_check_branch
      %125 = sbr.rel (0) target = $region73
    $region72: #{tpu_custom_call.1} parent=1 // pred_region
      _
    $region73: #{tpu_custom_call.1} parent=1 // pred_fallthru
      _
    // Predicated region
    $region74: #{tpu_custom_call.1} parent=1 // pred_check
      _
    $region75: #{tpu_custom_call.1} parent=1 // pred_check_branch
      %127 = sbr.rel (0) target = $region77
    $region76: #{tpu_custom_call.1} parent=1 // pred_region
      %128 = dma.done [#allocation3], 16
    $region77: #{tpu_custom_call.1} parent=1 // pred_fallthru
      _
    // Predicated region
    $region78: #{tpu_custom_call.1} parent=1 // pred_check
      _
    $region79: #{tpu_custom_call.1} parent=1 // pred_check_branch
      %130 = sbr.rel (0) target = $region81
    $region80: #{tpu_custom_call.1} parent=1 // pred_region
      %131 = dma.done [#allocation6], 256
    $region81: #{tpu_custom_call.1} parent=1 // pred_fallthru
      _
    // Predicated region
    $region82: #{tpu_custom_call.1} parent=1 // pred_check
      _
    $region83: #{tpu_custom_call.1} parent=1 // pred_check_branch
      %133 = sbr.rel (0) target = $region85
    $region84: #{tpu_custom_call.1} parent=1 // pred_region
      %134 = dma.done [#allocation6], 16
    $region85: #{tpu_custom_call.1} parent=1 // pred_fallthru
      _
    // Predicated region
    $region86: #{tpu_custom_call.1} parent=1 // pred_check
      _
    $region87: #{tpu_custom_call.1} parent=1 // pred_check_branch
      %136 = sbr.rel (0) target = $region89
    $region88: #{tpu_custom_call.1} parent=1 // pred_region
      %137 = dma.done [#allocation9], 256
    $region89: #{tpu_custom_call.1} parent=1 // pred_fallthru
      _
    // Predicated region
    $region90: #{tpu_custom_call.1} parent=1 // pred_check
      _
    $region91: #{tpu_custom_call.1} parent=1 // pred_check_branch
      %139 = sbr.rel (0) target = $region93
    $region92: #{tpu_custom_call.1} parent=1 // pred_region
      %140 = dma.done [#allocation9], 16
    $region93: #{tpu_custom_call.1} parent=1 // pred_fallthru
      _
    // Predicated region
    $region94: #{tpu_custom_call.1} parent=1 // pred_check
      _
    $region95: #{tpu_custom_call.1} parent=1 // pred_check_branch
      %142 = sbr.rel (0) target = $region97
    $region96: #{tpu_custom_call.1} parent=1 // pred_region
      %143 = dma.done [#allocation12], 256
    $region97: #{tpu_custom_call.1} parent=1 // pred_fallthru
      _
    // Predicated region
    $region98: #{tpu_custom_call.1} parent=1 // pred_check
      _
    $region99: #{tpu_custom_call.1} parent=1 // pred_check_branch
      %145 = sbr.rel (0) target = $region101
    $region100: #{tpu_custom_call.1} parent=1 // pred_region
      %146 = dma.done [#allocation12], 16
    $region101: #{tpu_custom_call.1} parent=1 // pred_fallthru
      _
    %v148 = vld [vmem:[%s0] sm:$0x3]
    %v149 = vld [vmem:[%s0 + $0x2] sm:$0x3]
    %v150 = vld [vmem:[%s0 + $0x4] sm:$0x3]
    %v151 = vld [vmem:[%s0 + $0x6] sm:$0x3]
    %v152 = vld [vmem:[%s0 + $0x8] sm:$0x3]
    %v153 = vld [vmem:[%s0 + $0xa] sm:$0x3]
    %v154 = vld [vmem:[%s0 + $0xc] sm:$0x3]
    %v155 = vld [vmem:[%s0 + $0xe] sm:$0x3]
    %v164 = vrot.slane %v148, 1
    %v165 = vrot.slane %v149, 1
    %v166 = vrot.slane %v150, 1
    %v167 = vrot.slane %v151, 1
    %v168 = vrot.slane %v152, 1
    %v169 = vrot.slane %v153, 1
    %v170 = vrot.slane %v154, 1
    %v171 = vrot.slane %v155, 1
    %v180 = vld [vmem:[%s1] sm:$0x3]
    %v181 = vld [vmem:[%s1 + $0x2] sm:$0x3]
    %v182 = vld [vmem:[%s1 + $0x4] sm:$0x3]
    %v183 = vld [vmem:[%s1 + $0x6] sm:$0x3]
    %v184 = vld [vmem:[%s1 + $0x8] sm:$0x3]
    %v185 = vld [vmem:[%s1 + $0xa] sm:$0x3]
    %v186 = vld [vmem:[%s1 + $0xc] sm:$0x3]
    %v187 = vld [vmem:[%s1 + $0xe] sm:$0x3]
    %v196 = vrot.slane %v180, 1
    %v197 = vrot.slane %v181, 1
    %v198 = vrot.slane %v182, 1
    %v199 = vrot.slane %v183, 1
    %v200 = vrot.slane %v184, 1
    %v201 = vrot.slane %v185, 1
    %v202 = vrot.slane %v186, 1
    %v203 = vrot.slane %v187, 1
    %v212 = vpack.c.bf16 %v148, %v148
    %v213 = vpack.c.bf16 %v149, %v149
    %v214 = vpack.c.bf16 %v150, %v150
    %v215 = vpack.c.bf16 %v151, %v151
    %v216 = vpack.c.bf16 %v152, %v152
    %v217 = vpack.c.bf16 %v153, %v153
    %v218 = vpack.c.bf16 %v154, %v154
    %v219 = vpack.c.bf16 %v155, %v155
    %v220 = vpack.c.bf16 %v164, %v164
    %v221 = vpack.c.bf16 %v165, %v165
    %v222 = vpack.c.bf16 %v166, %v166
    %v223 = vpack.c.bf16 %v167, %v167
    %v224 = vpack.c.bf16 %v168, %v168
    %v225 = vpack.c.bf16 %v169, %v169
    %v226 = vpack.c.bf16 %v170, %v170
    %v227 = vpack.c.bf16 %v171, %v171
    %v228 = vpack.c.bf16 %v180, %v180
    %v229 = vpack.c.bf16 %v181, %v181
    %v230 = vpack.c.bf16 %v182, %v182
    %v231 = vpack.c.bf16 %v183, %v183
    %v232 = vpack.c.bf16 %v184, %v184
    %v233 = vpack.c.bf16 %v185, %v185
    %v234 = vpack.c.bf16 %v186, %v186
    %v235 = vpack.c.bf16 %v187, %v187
    %v236 = vpack.c.bf16 %v196, %v196
    %v237 = vpack.c.bf16 %v197, %v197
    %v238 = vpack.c.bf16 %v198, %v198
    %v239 = vpack.c.bf16 %v199, %v199
    %v240 = vpack.c.bf16 %v200, %v200
    %v241 = vpack.c.bf16 %v201, %v201
    %v242 = vpack.c.bf16 %v202, %v202
    %v243 = vpack.c.bf16 %v203, %v203
    %v244 = vld [vmem:[%s2] sm:$0xf]
    %v245 = vld [vmem:[%s2 + $0x4] sm:$0xf]
    %v246 = vld [vmem:[%s2 + $0x8] sm:$0xf]
    %v247 = vld [vmem:[%s2 + $0xc] sm:$0xf]
    %v248 = vld [vmem:[#allocation2] sm:$0x1]
    %v250 = vlaneseq
    %v251 = vshrl.u32 %v250, 7
    %v252 = vsub.s32 0, %v251
    %v253 = vrot.slane %v248, %v252
    %v271 = vunpack.c.l.b16 %v212
    %v272 = vunpack.c.l.b16 %v213
    %v273 = vunpack.c.l.b16 %v214
    %v274 = vunpack.c.l.b16 %v215
    %v275 = vunpack.c.l.b16 %v216
    %v276 = vunpack.c.l.b16 %v217
    %v277 = vunpack.c.l.b16 %v218
    %v278 = vunpack.c.l.b16 %v219
    %v279 = vunpack.c.l.b16 %v220
    %v280 = vunpack.c.l.b16 %v221
    %v281 = vunpack.c.l.b16 %v222
    %v282 = vunpack.c.l.b16 %v223
    %v283 = vunpack.c.l.b16 %v224
    %v284 = vunpack.c.l.b16 %v225
    %v285 = vunpack.c.l.b16 %v226
    %v286 = vunpack.c.l.b16 %v227
    %v287 = vrot.slane %v272, 7
    %vm288 = vcmask 1041409
    %v289 = vsel %vm288, %v287, %v271
    %v290 = vrot.slane %v273, 6
    %vm291 = vcmask 1042434
    %v292 = vsel %vm291, %v290, %v289
    %v293 = vrot.slane %v274, 5
    %vm294 = vcmask 1043459
    %v295 = vsel %vm294, %v293, %v292
    %v296 = vrot.slane %v275, 4
    %vm297 = vcmask 1044484
    %v298 = vsel %vm297, %v296, %v295
    %v299 = vrot.slane %v276, 3
    %vm300 = vcmask 1045509
    %v301 = vsel %vm300, %v299, %v298
    %v302 = vrot.slane %v277, 2
    %vm303 = vcmask 1046534
    %v304 = vsel %vm303, %v302, %v301
    %v305 = vrot.slane %v278, 1
    %vm306 = vcmask 1047559
    %v307 = vsel %vm306, %v305, %v304
    %v308 = vrot.slane %v280, 7
    %v309 = vsel %vm288, %v308, %v279
    %v310 = vrot.slane %v281, 6
    %v311 = vsel %vm291, %v310, %v309
    %v312 = vrot.slane %v282, 5
    %v313 = vsel %vm294, %v312, %v311
    %v314 = vrot.slane %v283, 4
    %v315 = vsel %vm297, %v314, %v313
    %v316 = vrot.slane %v284, 3
    %v317 = vsel %vm300, %v316, %v315
    %v318 = vrot.slane %v285, 2
    %v319 = vsel %vm303, %v318, %v317
    %v320 = vrot.slane %v286, 1
    %v321 = vsel %vm306, %v320, %v319
    %v322 = vpack.c.b16 %v321, %v307
    %v327 = vunpack.c.l.b16 %v244
    %v328 = vunpack.c.l.b16 %v245
    %v329 = vunpack.c.l.b16 %v246
    %v330 = vunpack.c.l.b16 %v247
    %v331 = vpack.c.b16 %v328, %v327
    %v332 = vpack.c.b16 %v330, %v329
    %vm335 = vcmask 261120
    %v337 = vsel %vm335, %v322, 0
    %339 = vmatprep.subr.bf16.mxu0 0
    %340 = vmatpush1.bf16.msra.mxu0 0
    %341 = vmatprep.subr.bf16.mxu0 0
    %342 = vmatpush1.bf16.msra.mxu0 0
    %343 = vmatprep.subr.bf16.mxu0 0
    %344 = vmatpush1.bf16.msra.mxu0 0
    %345 = vmatprep.subr.bf16.mxu0 0
    %346 = vmatpush1.bf16.msra.mxu0 0
    %347 = vmatprep.subr.bf16.mxu0 0
    %348 = vmatpush1.bf16.msra.mxu0 0
    %349 = vmatprep.subr.bf16.mxu0 0
    %350 = vmatpush1.bf16.msra.mxu0 0
    %351 = vmatprep.subr.bf16.mxu0 0
    %352 = vmatpush1.bf16.msra.mxu0 %v332
    %353 = vmatprep.subr.bf16.mxu0 0
    %354 = vmatpush1.bf16.msra.mxu0 %v331
    %355 = vmatprep.subr.bf16.mxu0 0
    %356 = vmatpush2.bf16.msra.mxu0 0
    %357 = vmatprep.subr.bf16.mxu0 0
    %358 = vmatpush2.bf16.msra.mxu0 0
    %359 = vmatprep.subr.bf16.mxu0 0
    %360 = vmatpush2.bf16.msra.mxu0 0
    %361 = vmatprep.subr.bf16.mxu0 0
    %362 = vmatpush2.bf16.msra.mxu0 0
    %363 = vmatprep.subr.bf16.mxu0 0
    %364 = vmatpush2.bf16.msra.mxu0 0
    %365 = vmatprep.subr.bf16.mxu0 0
    %366 = vmatpush2.bf16.msra.mxu0 0
    %367 = vmatprep.subr.bf16.mxu0 0
    %368 = vmatpush2.bf16.msra.mxu0 0
    %369 = vmatprep.subr.bf16.mxu0 0
    %370 = vmatpush2.bf16.msra.mxu0 0
    %371 = vmatprep.mubr.bf16.mxu0 0
    %372 = vmatmul.mubr.bf16.gmra.mxu0 %v337
    %v373 = vpop.f32.mrf.mxu0
    %v374 = vadd.f32 %v253, %v373
    %v375 = vpop.f32.mrf.mxu0
    %v376 = vpop.f32.mrf.mxu0
    %v377 = vadd.f32 %v253, %v376
    %v378 = vpop.f32.mrf.mxu0
    %379 = vdwg.mxu0
    %v380 = vld [vmem:[#allocation5] sm:$0xf]
    %v381 = vld [vmem:[#allocation5 + $0x4] sm:$0xf]
    %v382 = vld [vmem:[#allocation5 + $0x8] sm:$0xf]
    %v383 = vld [vmem:[#allocation5 + $0xc] sm:$0xf]
    %v384 = vld [vmem:[#allocation7] sm:$0x1]
    %v386 = vlaneseq
    %v387 = vshrl.u32 %v386, 7
    %v388 = vsub.s32 0, %v387
    %v389 = vrot.slane %v384, %v388
    %v407 = vunpack.c.l.b16 %v228
    %v408 = vunpack.c.l.b16 %v229
    %v409 = vunpack.c.l.b16 %v230
    %v410 = vunpack.c.l.b16 %v231
    %v411 = vunpack.c.l.b16 %v232
    %v412 = vunpack.c.l.b16 %v233
    %v413 = vunpack.c.l.b16 %v234
    %v414 = vunpack.c.l.b16 %v235
    %v415 = vunpack.c.l.b16 %v236
    %v416 = vunpack.c.l.b16 %v237
    %v417 = vunpack.c.l.b16 %v238
    %v418 = vunpack.c.l.b16 %v239
    %v419 = vunpack.c.l.b16 %v240
    %v420 = vunpack.c.l.b16 %v241
    %v421 = vunpack.c.l.b16 %v242
    %v422 = vunpack.c.l.b16 %v243
    %v423 = vrot.slane %v408, 7
    %v424 = vsel %vm288, %v423, %v407
    %v425 = vrot.slane %v409, 6
    %v426 = vsel %vm291, %v425, %v424
    %v427 = vrot.slane %v410, 5
    %v428 = vsel %vm294, %v427, %v426
    %v429 = vrot.slane %v411, 4
    %v430 = vsel %vm297, %v429, %v428
    %v431 = vrot.slane %v412, 3
    %v432 = vsel %vm300, %v431, %v430
    %v433 = vrot.slane %v413, 2
    %v434 = vsel %vm303, %v433, %v432
    %v435 = vrot.slane %v414, 1
    %v436 = vsel %vm306, %v435, %v434
    %v437 = vrot.slane %v416, 7
    %v438 = vsel %vm288, %v437, %v415
    %v439 = vrot.slane %v417, 6
    %v440 = vsel %vm291, %v439, %v438
    %v441 = vrot.slane %v418, 5
    %v442 = vsel %vm294, %v441, %v440
    %v443 = vrot.slane %v419, 4
    %v444 = vsel %vm297, %v443, %v442
    %v445 = vrot.slane %v420, 3
    %v446 = vsel %vm300, %v445, %v444
    %v447 = vrot.slane %v421, 2
    %v448 = vsel %vm303, %v447, %v446
    %v449 = vrot.slane %v422, 1
    %v450 = vsel %vm306, %v449, %v448
    %v451 = vpack.c.b16 %v450, %v436
    %v456 = vunpack.c.l.b16 %v380
    %v457 = vunpack.c.l.b16 %v381
    %v458 = vunpack.c.l.b16 %v382
    %v459 = vunpack.c.l.b16 %v383
    %v460 = vpack.c.b16 %v457, %v456
    %v461 = vpack.c.b16 %v459, %v458
    %v465 = vsel %vm335, %v451, 0
    %467 = vmatprep.subr.bf16.mxu0 0
    %468 = vmatpush1.bf16.msra.mxu0 0
    %469 = vmatprep.subr.bf16.mxu0 0
    %470 = vmatpush1.bf16.msra.mxu0 0
    %471 = vmatprep.subr.bf16.mxu0 0
    %472 = vmatpush1.bf16.msra.mxu0 0
    %473 = vmatprep.subr.bf16.mxu0 0
    %474 = vmatpush1.bf16.msra.mxu0 0
    %475 = vmatprep.subr.bf16.mxu0 0
    %476 = vmatpush1.bf16.msra.mxu0 0
    %477 = vmatprep.subr.bf16.mxu0 0
    %478 = vmatpush1.bf16.msra.mxu0 0
    %479 = vmatprep.subr.bf16.mxu0 0
    %480 = vmatpush1.bf16.msra.mxu0 %v461
    %481 = vmatprep.subr.bf16.mxu0 0
    %482 = vmatpush1.bf16.msra.mxu0 %v460
    %483 = vmatprep.subr.bf16.mxu0 0
    %484 = vmatpush2.bf16.msra.mxu0 0
    %485 = vmatprep.subr.bf16.mxu0 0
    %486 = vmatpush2.bf16.msra.mxu0 0
    %487 = vmatprep.subr.bf16.mxu0 0
    %488 = vmatpush2.bf16.msra.mxu0 0
    %489 = vmatprep.subr.bf16.mxu0 0
    %490 = vmatpush2.bf16.msra.mxu0 0
    %491 = vmatprep.subr.bf16.mxu0 0
    %492 = vmatpush2.bf16.msra.mxu0 0
    %493 = vmatprep.subr.bf16.mxu0 0
    %494 = vmatpush2.bf16.msra.mxu0 0
    %495 = vmatprep.subr.bf16.mxu0 0
    %496 = vmatpush2.bf16.msra.mxu0 0
    %497 = vmatprep.subr.bf16.mxu0 0
    %498 = vmatpush2.bf16.msra.mxu0 0
    %499 = vmatprep.mubr.bf16.mxu0 0
    %500 = vmatmul.mubr.bf16.gmra.mxu0 %v465
    %v501 = vpop.f32.mrf.mxu0
    %v502 = vadd.f32 %v389, %v501
    %v503 = vpop.f32.mrf.mxu0
    %v504 = vpop.f32.mrf.mxu0
    %v505 = vadd.f32 %v389, %v504
    %v506 = vpop.f32.mrf.mxu0
    %507 = vdwg.mxu0
    %v508 = vld [vmem:[#allocation8] sm:$0xf]
    %v509 = vld [vmem:[#allocation8 + $0x4] sm:$0xf]
    %v510 = vld [vmem:[#allocation8 + $0x8] sm:$0xf]
    %v511 = vld [vmem:[#allocation8 + $0xc] sm:$0xf]
    %v512 = vld [vmem:[#allocation10] sm:$0x1]
    %v514 = vlaneseq
    %v515 = vshrl.u32 %v514, 7
    %v516 = vsub.s32 0, %v515
    %v517 = vrot.slane %v512, %v516
    %v523 = vunpack.c.l.b16 %v508
    %v524 = vunpack.c.l.b16 %v509
    %v525 = vunpack.c.l.b16 %v510
    %v526 = vunpack.c.l.b16 %v511
    %v527 = vpack.c.b16 %v524, %v523
    %v528 = vpack.c.b16 %v526, %v525
    %531 = vmatprep.subr.bf16.mxu0 0
    %532 = vmatpush1.bf16.msra.mxu0 0
    %533 = vmatprep.subr.bf16.mxu0 0
    %534 = vmatpush1.bf16.msra.mxu0 0
    %535 = vmatprep.subr.bf16.mxu0 0
    %536 = vmatpush1.bf16.msra.mxu0 0
    %537 = vmatprep.subr.bf16.mxu0 0
    %538 = vmatpush1.bf16.msra.mxu0 0
    %539 = vmatprep.subr.bf16.mxu0 0
    %540 = vmatpush1.bf16.msra.mxu0 0
    %541 = vmatprep.subr.bf16.mxu0 0
    %542 = vmatpush1.bf16.msra.mxu0 0
    %543 = vmatprep.subr.bf16.mxu0 0
    %544 = vmatpush1.bf16.msra.mxu0 %v528
    %545 = vmatprep.subr.bf16.mxu0 0
    %546 = vmatpush1.bf16.msra.mxu0 %v527
    %547 = vmatprep.subr.bf16.mxu0 0
    %548 = vmatpush2.bf16.msra.mxu0 0
    %549 = vmatprep.subr.bf16.mxu0 0
    %550 = vmatpush2.bf16.msra.mxu0 0
    %551 = vmatprep.subr.bf16.mxu0 0
    %552 = vmatpush2.bf16.msra.mxu0 0
    %553 = vmatprep.subr.bf16.mxu0 0
    %554 = vmatpush2.bf16.msra.mxu0 0
    %555 = vmatprep.subr.bf16.mxu0 0
    %556 = vmatpush2.bf16.msra.mxu0 0
    %557 = vmatprep.subr.bf16.mxu0 0
    %558 = vmatpush2.bf16.msra.mxu0 0
    %559 = vmatprep.subr.bf16.mxu0 0
    %560 = vmatpush2.bf16.msra.mxu0 0
    %561 = vmatprep.subr.bf16.mxu0 0
    %562 = vmatpush2.bf16.msra.mxu0 0
    %563 = vmatprep.mubr.bf16.mxu0 0
    %564 = vmatmul.mubr.bf16.gmra.mxu0 %v465
    %v565 = vpop.f32.mrf.mxu0
    %v566 = vadd.f32 %v517, %v565
    %v567 = vpop.f32.mrf.mxu0
    %v568 = vpop.f32.mrf.mxu0
    %v569 = vadd.f32 %v517, %v568
    %v570 = vpop.f32.mrf.mxu0
    %571 = vdwg.mxu0
    %v572 = vpack.c.bf16 %v377, %v374
    %574 = vrot.lane.b32.xlu0 %v572, 120
    %v575 = vpop.permute.xlu0 %574
    %576 = vrot.lane.b32.xlu0 %v572, 112
    %v577 = vpop.permute.xlu0 %576
    %578 = vrot.lane.b32.xlu0 %v572, 104
    %v579 = vpop.permute.xlu0 %578
    %v580 = vunpack.c.l.b16 %v572
    %v581 = vunpack.c.h.b16 %v572
    %v582 = vunpack.c.l.b16 %v575
    %v583 = vunpack.c.h.b16 %v575
    %v584 = vunpack.c.l.b16 %v577
    %v585 = vunpack.c.h.b16 %v577
    %v586 = vunpack.c.l.b16 %v579
    %v587 = vunpack.c.h.b16 %v579
    %v588 = vpack.c.b16 %v580, %v580
    %v589 = vpack.c.b16 %v581, %v581
    %v590 = vpack.c.b16 %v582, %v582
    %v591 = vpack.c.b16 %v583, %v583
    %v592 = vpack.c.b16 %v584, %v584
    %v593 = vpack.c.b16 %v585, %v585
    %v594 = vpack.c.b16 %v586, %v586
    %v595 = vpack.c.b16 %v587, %v587
    %v596 = vpack.c.bf16 %v505, %v502
    %598 = vrot.lane.b32.xlu0 %v596, 120
    %v599 = vpop.permute.xlu0 %598
    %600 = vrot.lane.b32.xlu0 %v596, 112
    %v601 = vpop.permute.xlu0 %600
    %602 = vrot.lane.b32.xlu0 %v596, 104
    %v603 = vpop.permute.xlu0 %602
    %v604 = vunpack.c.l.b16 %v596
    %v605 = vunpack.c.h.b16 %v596
    %v606 = vunpack.c.l.b16 %v599
    %v607 = vunpack.c.h.b16 %v599
    %v608 = vunpack.c.l.b16 %v601
    %v609 = vunpack.c.h.b16 %v601
    %v610 = vunpack.c.l.b16 %v603
    %v611 = vunpack.c.h.b16 %v603
    %v612 = vpack.c.b16 %v604, %v604
    %v613 = vpack.c.b16 %v605, %v605
    %v614 = vpack.c.b16 %v606, %v606
    %v615 = vpack.c.b16 %v607, %v607
    %v616 = vpack.c.b16 %v608, %v608
    %v617 = vpack.c.b16 %v609, %v609
    %v618 = vpack.c.b16 %v610, %v610
    %v619 = vpack.c.b16 %v611, %v611
    %v620 = vpack.c.bf16 %v569, %v566
    %622 = vrot.lane.b32.xlu0 %v620, 120
    %v623 = vpop.permute.xlu0 %622
    %624 = vrot.lane.b32.xlu0 %v620, 112
    %v625 = vpop.permute.xlu0 %624
    %626 = vrot.lane.b32.xlu0 %v620, 104
    %v627 = vpop.permute.xlu0 %626
    %v628 = vunpack.c.l.b16 %v620
    %v629 = vunpack.c.h.b16 %v620
    %v630 = vunpack.c.l.b16 %v623
    %v631 = vunpack.c.h.b16 %v623
    %v632 = vunpack.c.l.b16 %v625
    %v633 = vunpack.c.h.b16 %v625
    %v634 = vunpack.c.l.b16 %v627
    %v635 = vunpack.c.h.b16 %v627
    %v636 = vpack.c.b16 %v628, %v628
    %v637 = vpack.c.b16 %v629, %v629
    %v638 = vpack.c.b16 %v630, %v630
    %v639 = vpack.c.b16 %v631, %v631
    %v640 = vpack.c.b16 %v632, %v632
    %v641 = vpack.c.b16 %v633, %v633
    %v642 = vpack.c.b16 %v634, %v634
    %v643 = vpack.c.b16 %v635, %v635
    %vm644 = vcmask 64512
    %v646 = vsel %vm644, %v588, 0
    %v649 = vsel %vm644, %v612, 0
    %651 = vmatprep.subr.bf16.mxu0 0
    %652 = vmatpush1.bf16.xpose.msra.mxu0 0
    %653 = vmatprep.subr.bf16.mxu0 0
    %654 = vmatpush1.bf16.xpose.msra.mxu0 0
    %655 = vmatprep.subr.bf16.mxu0 0
    %656 = vmatpush1.bf16.xpose.msra.mxu0 0
    %657 = vmatprep.subr.bf16.mxu0 0
    %658 = vmatpush1.bf16.xpose.msra.mxu0 0
    %659 = vmatprep.subr.bf16.mxu0 0
    %660 = vmatpush1.bf16.xpose.msra.mxu0 0
    %661 = vmatprep.subr.bf16.mxu0 0
    %662 = vmatpush1.bf16.xpose.msra.mxu0 0
    %663 = vmatprep.subr.bf16.mxu0 0
    %664 = vmatpush1.bf16.xpose.msra.mxu0 0
    %665 = vmatprep.subr.bf16.mxu0 0
    %666 = vmatpush1.bf16.xpose.msra.mxu0 %v649
    %667 = vmatprep.subr.bf16.mxu0 0
    %668 = vmatpush2.bf16.xpose.msra.mxu0 0
    %669 = vmatprep.subr.bf16.mxu0 0
    %670 = vmatpush2.bf16.xpose.msra.mxu0 0
    %671 = vmatprep.subr.bf16.mxu0 0
    %672 = vmatpush2.bf16.xpose.msra.mxu0 0
    %673 = vmatprep.subr.bf16.mxu0 0
    %674 = vmatpush2.bf16.xpose.msra.mxu0 0
    %675 = vmatprep.subr.bf16.mxu0 0
    %676 = vmatpush2.bf16.xpose.msra.mxu0 0
    %677 = vmatprep.subr.bf16.mxu0 0
    %678 = vmatpush2.bf16.xpose.msra.mxu0 0
    %679 = vmatprep.subr.bf16.mxu0 0
    %680 = vmatpush2.bf16.xpose.msra.mxu0 0
    %681 = vmatprep.subr.bf16.mxu0 0
    %682 = vmatpush2.bf16.xpose.msra.mxu0 0
    %683 = vmatprep.mubr.bf16.mxu0 0
    %684 = vmatmul.mubr.bf16.gmra.mxu0 %v646
    %v685 = vpop.f32.mrf.mxu0
    %v686 = vadd.f32 0.0, %v685
    %v687 = vpop.f32.mrf.mxu0
    %v688 = vpop.f32.mrf.mxu0
    %v689 = vpop.f32.mrf.mxu0
    %690 = vdwg.mxu0
    %v692 = vsel %vm644, %v589, 0
    %v695 = vsel %vm644, %v613, 0
    %697 = vmatprep.subr.bf16.mxu0 0
    %698 = vmatpush1.bf16.xpose.msra.mxu0 0
    %699 = vmatprep.subr.bf16.mxu0 0
    %700 = vmatpush1.bf16.xpose.msra.mxu0 0
    %701 = vmatprep.subr.bf16.mxu0 0
    %702 = vmatpush1.bf16.xpose.msra.mxu0 0
    %703 = vmatprep.subr.bf16.mxu0 0
    %704 = vmatpush1.bf16.xpose.msra.mxu0 0
    %705 = vmatprep.subr.bf16.mxu0 0
    %706 = vmatpush1.bf16.xpose.msra.mxu0 0
    %707 = vmatprep.subr.bf16.mxu0 0
    %708 = vmatpush1.bf16.xpose.msra.mxu0 0
    %709 = vmatprep.subr.bf16.mxu0 0
    %710 = vmatpush1.bf16.xpose.msra.mxu0 0
    %711 = vmatprep.subr.bf16.mxu0 0
    %712 = vmatpush1.bf16.xpose.msra.mxu0 %v695
    %713 = vmatprep.subr.bf16.mxu0 0
    %714 = vmatpush2.bf16.xpose.msra.mxu0 0
    %715 = vmatprep.subr.bf16.mxu0 0
    %716 = vmatpush2.bf16.xpose.msra.mxu0 0
    %717 = vmatprep.subr.bf16.mxu0 0
    %718 = vmatpush2.bf16.xpose.msra.mxu0 0
    %719 = vmatprep.subr.bf16.mxu0 0
    %720 = vmatpush2.bf16.xpose.msra.mxu0 0
    %721 = vmatprep.subr.bf16.mxu0 0
    %722 = vmatpush2.bf16.xpose.msra.mxu0 0
    %723 = vmatprep.subr.bf16.mxu0 0
    %724 = vmatpush2.bf16.xpose.msra.mxu0 0
    %725 = vmatprep.subr.bf16.mxu0 0
    %726 = vmatpush2.bf16.xpose.msra.mxu0 0
    %727 = vmatprep.subr.bf16.mxu0 0
    %728 = vmatpush2.bf16.xpose.msra.mxu0 0
    %729 = vmatprep.mubr.bf16.mxu0 0
    %730 = vmatmul.mubr.bf16.gmra.mxu0 %v692
    %v731 = vpop.f32.mrf.mxu0
    %v732 = vadd.f32 0.0, %v731
    %v733 = vpop.f32.mrf.mxu0
    %v734 = vpop.f32.mrf.mxu0
    %v735 = vpop.f32.mrf.mxu0
    %736 = vdwg.mxu0
    %v738 = vsel %vm644, %v590, 0
    %v741 = vsel %vm644, %v614, 0
    %743 = vmatprep.subr.bf16.mxu0 0
    %744 = vmatpush1.bf16.xpose.msra.mxu0 0
    %745 = vmatprep.subr.bf16.mxu0 0
    %746 = vmatpush1.bf16.xpose.msra.mxu0 0
    %747 = vmatprep.subr.bf16.mxu0 0
    %748 = vmatpush1.bf16.xpose.msra.mxu0 0
    %749 = vmatprep.subr.bf16.mxu0 0
    %750 = vmatpush1.bf16.xpose.msra.mxu0 0
    %751 = vmatprep.subr.bf16.mxu0 0
    %752 = vmatpush1.bf16.xpose.msra.mxu0 0
    %753 = vmatprep.subr.bf16.mxu0 0
    %754 = vmatpush1.bf16.xpose.msra.mxu0 0
    %755 = vmatprep.subr.bf16.mxu0 0
    %756 = vmatpush1.bf16.xpose.msra.mxu0 0
    %757 = vmatprep.subr.bf16.mxu0 0
    %758 = vmatpush1.bf16.xpose.msra.mxu0 %v741
    %759 = vmatprep.subr.bf16.mxu0 0
    %760 = vmatpush2.bf16.xpose.msra.mxu0 0
    %761 = vmatprep.subr.bf16.mxu0 0
    %762 = vmatpush2.bf16.xpose.msra.mxu0 0
    %763 = vmatprep.subr.bf16.mxu0 0
    %764 = vmatpush2.bf16.xpose.msra.mxu0 0
    %765 = vmatprep.subr.bf16.mxu0 0
    %766 = vmatpush2.bf16.xpose.msra.mxu0 0
    %767 = vmatprep.subr.bf16.mxu0 0
    %768 = vmatpush2.bf16.xpose.msra.mxu0 0
    %769 = vmatprep.subr.bf16.mxu0 0
    %770 = vmatpush2.bf16.xpose.msra.mxu0 0
    %771 = vmatprep.subr.bf16.mxu0 0
    %772 = vmatpush2.bf16.xpose.msra.mxu0 0
    %773 = vmatprep.subr.bf16.mxu0 0
    %774 = vmatpush2.bf16.xpose.msra.mxu0 0
    %775 = vmatprep.mubr.bf16.mxu0 0
    %776 = vmatmul.mubr.bf16.gmra.mxu0 %v738
    %v777 = vpop.f32.mrf.mxu0
    %v778 = vadd.f32 0.0, %v777
    %v779 = vpop.f32.mrf.mxu0
    %v780 = vpop.f32.mrf.mxu0
    %v781 = vpop.f32.mrf.mxu0
    %782 = vdwg.mxu0
    %v784 = vsel %vm644, %v591, 0
    %v787 = vsel %vm644, %v615, 0
    %789 = vmatprep.subr.bf16.mxu0 0
    %790 = vmatpush1.bf16.xpose.msra.mxu0 0
    %791 = vmatprep.subr.bf16.mxu0 0
    %792 = vmatpush1.bf16.xpose.msra.mxu0 0
    %793 = vmatprep.subr.bf16.mxu0 0
    %794 = vmatpush1.bf16.xpose.msra.mxu0 0
    %795 = vmatprep.subr.bf16.mxu0 0
    %796 = vmatpush1.bf16.xpose.msra.mxu0 0
    %797 = vmatprep.subr.bf16.mxu0 0
    %798 = vmatpush1.bf16.xpose.msra.mxu0 0
    %799 = vmatprep.subr.bf16.mxu0 0
    %800 = vmatpush1.bf16.xpose.msra.mxu0 0
    %801 = vmatprep.subr.bf16.mxu0 0
    %802 = vmatpush1.bf16.xpose.msra.mxu0 0
    %803 = vmatprep.subr.bf16.mxu0 0
    %804 = vmatpush1.bf16.xpose.msra.mxu0 %v787
    %805 = vmatprep.subr.bf16.mxu0 0
    %806 = vmatpush2.bf16.xpose.msra.mxu0 0
    %807 = vmatprep.subr.bf16.mxu0 0
    %808 = vmatpush2.bf16.xpose.msra.mxu0 0
    %809 = vmatprep.subr.bf16.mxu0 0
    %810 = vmatpush2.bf16.xpose.msra.mxu0 0
    %811 = vmatprep.subr.bf16.mxu0 0
    %812 = vmatpush2.bf16.xpose.msra.mxu0 0
    %813 = vmatprep.subr.bf16.mxu0 0
    %814 = vmatpush2.bf16.xpose.msra.mxu0 0
    %815 = vmatprep.subr.bf16.mxu0 0
    %816 = vmatpush2.bf16.xpose.msra.mxu0 0
    %817 = vmatprep.subr.bf16.mxu0 0
    %818 = vmatpush2.bf16.xpose.msra.mxu0 0
    %819 = vmatprep.subr.bf16.mxu0 0
    %820 = vmatpush2.bf16.xpose.msra.mxu0 0
    %821 = vmatprep.mubr.bf16.mxu0 0
    %822 = vmatmul.mubr.bf16.gmra.mxu0 %v784
    %v823 = vpop.f32.mrf.mxu0
    %v824 = vadd.f32 0.0, %v823
    %v825 = vpop.f32.mrf.mxu0
    %v826 = vpop.f32.mrf.mxu0
    %v827 = vpop.f32.mrf.mxu0
    %828 = vdwg.mxu0
    %v830 = vsel %vm644, %v592, 0
    %v833 = vsel %vm644, %v616, 0
    %835 = vmatprep.subr.bf16.mxu0 0
    %836 = vmatpush1.bf16.xpose.msra.mxu0 0
    %837 = vmatprep.subr.bf16.mxu0 0
    %838 = vmatpush1.bf16.xpose.msra.mxu0 0
    %839 = vmatprep.subr.bf16.mxu0 0
    %840 = vmatpush1.bf16.xpose.msra.mxu0 0
    %841 = vmatprep.subr.bf16.mxu0 0
    %842 = vmatpush1.bf16.xpose.msra.mxu0 0
    %843 = vmatprep.subr.bf16.mxu0 0
    %844 = vmatpush1.bf16.xpose.msra.mxu0 0
    %845 = vmatprep.subr.bf16.mxu0 0
    %846 = vmatpush1.bf16.xpose.msra.mxu0 0
    %847 = vmatprep.subr.bf16.mxu0 0
    %848 = vmatpush1.bf16.xpose.msra.mxu0 0
    %849 = vmatprep.subr.bf16.mxu0 0
    %850 = vmatpush1.bf16.xpose.msra.mxu0 %v833
    %851 = vmatprep.subr.bf16.mxu0 0
    %852 = vmatpush2.bf16.xpose.msra.mxu0 0
    %853 = vmatprep.subr.bf16.mxu0 0
    %854 = vmatpush2.bf16.xpose.msra.mxu0 0
    %855 = vmatprep.subr.bf16.mxu0 0
    %856 = vmatpush2.bf16.xpose.msra.mxu0 0
    %857 = vmatprep.subr.bf16.mxu0 0
    %858 = vmatpush2.bf16.xpose.msra.mxu0 0
    %859 = vmatprep.subr.bf16.mxu0 0
    %860 = vmatpush2.bf16.xpose.msra.mxu0 0
    %861 = vmatprep.subr.bf16.mxu0 0
    %862 = vmatpush2.bf16.xpose.msra.mxu0 0
    %863 = vmatprep.subr.bf16.mxu0 0
    %864 = vmatpush2.bf16.xpose.msra.mxu0 0
    %865 = vmatprep.subr.bf16.mxu0 0
    %866 = vmatpush2.bf16.xpose.msra.mxu0 0
    %867 = vmatprep.mubr.bf16.mxu0 0
    %868 = vmatmul.mubr.bf16.gmra.mxu0 %v830
    %v869 = vpop.f32.mrf.mxu0
    %v870 = vadd.f32 0.0, %v869
    %v871 = vpop.f32.mrf.mxu0
    %v872 = vpop.f32.mrf.mxu0
    %v873 = vpop.f32.mrf.mxu0
    %874 = vdwg.mxu0
    %v876 = vsel %vm644, %v593, 0
    %v879 = vsel %vm644, %v617, 0
    %881 = vmatprep.subr.bf16.mxu0 0
    %882 = vmatpush1.bf16.xpose.msra.mxu0 0
    %883 = vmatprep.subr.bf16.mxu0 0
    %884 = vmatpush1.bf16.xpose.msra.mxu0 0
    %885 = vmatprep.subr.bf16.mxu0 0
    %886 = vmatpush1.bf16.xpose.msra.mxu0 0
    %887 = vmatprep.subr.bf16.mxu0 0
    %888 = vmatpush1.bf16.xpose.msra.mxu0 0
    %889 = vmatprep.subr.bf16.mxu0 0
    %890 = vmatpush1.bf16.xpose.msra.mxu0 0
    %891 = vmatprep.subr.bf16.mxu0 0
    %892 = vmatpush1.bf16.xpose.msra.mxu0 0
    %893 = vmatprep.subr.bf16.mxu0 0
    %894 = vmatpush1.bf16.xpose.msra.mxu0 0
    %895 = vmatprep.subr.bf16.mxu0 0
    %896 = vmatpush1.bf16.xpose.msra.mxu0 %v879
    %897 = vmatprep.subr.bf16.mxu0 0
    %898 = vmatpush2.bf16.xpose.msra.mxu0 0
    %899 = vmatprep.subr.bf16.mxu0 0
    %900 = vmatpush2.bf16.xpose.msra.mxu0 0
    %901 = vmatprep.subr.bf16.mxu0 0
    %902 = vmatpush2.bf16.xpose.msra.mxu0 0
    %903 = vmatprep.subr.bf16.mxu0 0
    %904 = vmatpush2.bf16.xpose.msra.mxu0 0
    %905 = vmatprep.subr.bf16.mxu0 0
    %906 = vmatpush2.bf16.xpose.msra.mxu0 0
    %907 = vmatprep.subr.bf16.mxu0 0
    %908 = vmatpush2.bf16.xpose.msra.mxu0 0
    %909 = vmatprep.subr.bf16.mxu0 0
    %910 = vmatpush2.bf16.xpose.msra.mxu0 0
    %911 = vmatprep.subr.bf16.mxu0 0
    %912 = vmatpush2.bf16.xpose.msra.mxu0 0
    %913 = vmatprep.mubr.bf16.mxu0 0
    %914 = vmatmul.mubr.bf16.gmra.mxu0 %v876
    %v915 = vpop.f32.mrf.mxu0
    %v916 = vadd.f32 0.0, %v915
    %v917 = vpop.f32.mrf.mxu0
    %v918 = vpop.f32.mrf.mxu0
    %v919 = vpop.f32.mrf.mxu0
    %920 = vdwg.mxu0
    %v922 = vsel %vm644, %v594, 0
    %v925 = vsel %vm644, %v618, 0
    %927 = vmatprep.subr.bf16.mxu0 0
    %928 = vmatpush1.bf16.xpose.msra.mxu0 0
    %929 = vmatprep.subr.bf16.mxu0 0
    %930 = vmatpush1.bf16.xpose.msra.mxu0 0
    %931 = vmatprep.subr.bf16.mxu0 0
    %932 = vmatpush1.bf16.xpose.msra.mxu0 0
    %933 = vmatprep.subr.bf16.mxu0 0
    %934 = vmatpush1.bf16.xpose.msra.mxu0 0
    %935 = vmatprep.subr.bf16.mxu0 0
    %936 = vmatpush1.bf16.xpose.msra.mxu0 0
    %937 = vmatprep.subr.bf16.mxu0 0
    %938 = vmatpush1.bf16.xpose.msra.mxu0 0
    %939 = vmatprep.subr.bf16.mxu0 0
    %940 = vmatpush1.bf16.xpose.msra.mxu0 0
    %941 = vmatprep.subr.bf16.mxu0 0
    %942 = vmatpush1.bf16.xpose.msra.mxu0 %v925
    %943 = vmatprep.subr.bf16.mxu0 0
    %944 = vmatpush2.bf16.xpose.msra.mxu0 0
    %945 = vmatprep.subr.bf16.mxu0 0
    %946 = vmatpush2.bf16.xpose.msra.mxu0 0
    %947 = vmatprep.subr.bf16.mxu0 0
    %948 = vmatpush2.bf16.xpose.msra.mxu0 0
    %949 = vmatprep.subr.bf16.mxu0 0
    %950 = vmatpush2.bf16.xpose.msra.mxu0 0
    %951 = vmatprep.subr.bf16.mxu0 0
    %952 = vmatpush2.bf16.xpose.msra.mxu0 0
    %953 = vmatprep.subr.bf16.mxu0 0
    %954 = vmatpush2.bf16.xpose.msra.mxu0 0
    %955 = vmatprep.subr.bf16.mxu0 0
    %956 = vmatpush2.bf16.xpose.msra.mxu0 0
    %957 = vmatprep.subr.bf16.mxu0 0
    %958 = vmatpush2.bf16.xpose.msra.mxu0 0
    %959 = vmatprep.mubr.bf16.mxu0 0
    %960 = vmatmul.mubr.bf16.gmra.mxu0 %v922
    %v961 = vpop.f32.mrf.mxu0
    %v962 = vadd.f32 0.0, %v961
    %v963 = vpop.f32.mrf.mxu0
    %v964 = vpop.f32.mrf.mxu0
    %v965 = vpop.f32.mrf.mxu0
    %966 = vdwg.mxu0
    %v968 = vsel %vm644, %v595, 0
    %v971 = vsel %vm644, %v619, 0
    %973 = vmatprep.subr.bf16.mxu0 0
    %974 = vmatpush1.bf16.xpose.msra.mxu0 0
    %975 = vmatprep.subr.bf16.mxu0 0
    %976 = vmatpush1.bf16.xpose.msra.mxu0 0
    %977 = vmatprep.subr.bf16.mxu0 0
    %978 = vmatpush1.bf16.xpose.msra.mxu0 0
    %979 = vmatprep.subr.bf16.mxu0 0
    %980 = vmatpush1.bf16.xpose.msra.mxu0 0
    %981 = vmatprep.subr.bf16.mxu0 0
    %982 = vmatpush1.bf16.xpose.msra.mxu0 0
    %983 = vmatprep.subr.bf16.mxu0 0
    %984 = vmatpush1.bf16.xpose.msra.mxu0 0
    %985 = vmatprep.subr.bf16.mxu0 0
    %986 = vmatpush1.bf16.xpose.msra.mxu0 0
    %987 = vmatprep.subr.bf16.mxu0 0
    %988 = vmatpush1.bf16.xpose.msra.mxu0 %v971
    %989 = vmatprep.subr.bf16.mxu0 0
    %990 = vmatpush2.bf16.xpose.msra.mxu0 0
    %991 = vmatprep.subr.bf16.mxu0 0
    %992 = vmatpush2.bf16.xpose.msra.mxu0 0
    %993 = vmatprep.subr.bf16.mxu0 0
    %994 = vmatpush2.bf16.xpose.msra.mxu0 0
    %995 = vmatprep.subr.bf16.mxu0 0
    %996 = vmatpush2.bf16.xpose.msra.mxu0 0
    %997 = vmatprep.subr.bf16.mxu0 0
    %998 = vmatpush2.bf16.xpose.msra.mxu0 0
    %999 = vmatprep.subr.bf16.mxu0 0
    %1000 = vmatpush2.bf16.xpose.msra.mxu0 0
    %1001 = vmatprep.subr.bf16.mxu0 0
    %1002 = vmatpush2.bf16.xpose.msra.mxu0 0
    %1003 = vmatprep.subr.bf16.mxu0 0
    %1004 = vmatpush2.bf16.xpose.msra.mxu0 0
    %1005 = vmatprep.mubr.bf16.mxu0 0
    %1006 = vmatmul.mubr.bf16.gmra.mxu0 %v968
    %v1007 = vpop.f32.mrf.mxu0
    %v1008 = vadd.f32 0.0, %v1007
    %v1009 = vpop.f32.mrf.mxu0
    %v1010 = vpop.f32.mrf.mxu0
    %v1011 = vpop.f32.mrf.mxu0
    %1012 = vdwg.mxu0
    %v1013 = vsel %vm644, %v686, -inf
    %1014 = vmax.xlane.f32.xlu0 %v1013
    %v1015 = vpop.xlane.xlu0 %1014
    %v1016 = vsel %vm644, %v732, -inf
    %1017 = vmax.xlane.f32.xlu0 %v1016
    %v1018 = vpop.xlane.xlu0 %1017
    %v1019 = vsel %vm644, %v778, -inf
    %1020 = vmax.xlane.f32.xlu0 %v1019
    %v1021 = vpop.xlane.xlu0 %1020
    %v1022 = vsel %vm644, %v824, -inf
    %1023 = vmax.xlane.f32.xlu0 %v1022
    %v1024 = vpop.xlane.xlu0 %1023
    %v1025 = vsel %vm644, %v870, -inf
    %1026 = vmax.xlane.f32.xlu0 %v1025
    %v1027 = vpop.xlane.xlu0 %1026
    %v1028 = vsel %vm644, %v916, -inf
    %1029 = vmax.xlane.f32.xlu0 %v1028
    %v1030 = vpop.xlane.xlu0 %1029
    %v1031 = vsel %vm644, %v962, -inf
    %1032 = vmax.xlane.f32.xlu0 %v1031
    %v1033 = vpop.xlane.xlu0 %1032
    %v1034 = vsel %vm644, %v1008, -inf
    %1035 = vmax.xlane.f32.xlu0 %v1034
    %v1036 = vpop.xlane.xlu0 %1035
    %v1037 = vsub.f32 %v686, %v1015
    %v1038 = vsub.f32 %v732, %v1018
    %v1039 = vsub.f32 %v778, %v1021
    %v1040 = vsub.f32 %v824, %v1024
    %v1041 = vsub.f32 %v870, %v1027
    %v1042 = vsub.f32 %v916, %v1030
    %v1043 = vsub.f32 %v962, %v1033
    %v1044 = vsub.f32 %v1008, %v1036
    %v1045 = vmul.f32 %v1037, 1.442695
    %v1046 = vpow.pop %v1045
    %v1047 = vmul.f32 %v1038, 1.442695
    %v1048 = vpow.pop %v1047
    %v1049 = vmul.f32 %v1039, 1.442695
    %v1050 = vpow.pop %v1049
    %v1051 = vmul.f32 %v1040, 1.442695
    %v1052 = vpow.pop %v1051
    %v1053 = vmul.f32 %v1041, 1.442695
    %v1054 = vpow.pop %v1053
    %v1055 = vmul.f32 %v1042, 1.442695
    %v1056 = vpow.pop %v1055
    %v1057 = vmul.f32 %v1043, 1.442695
    %v1058 = vpow.pop %v1057
    %v1059 = vmul.f32 %v1044, 1.442695
    %v1060 = vpow.pop %v1059
    %v1061 = vsel %vm644, %v1046, 0.0
    %1062 = vadd.xlane.f32.xlu0 %v1061
    %v1063 = vpop.xlane.xlu0 %1062
    %v1064 = vsel %vm644, %v1048, 0.0
    %1065 = vadd.xlane.f32.xlu0 %v1064
    %v1066 = vpop.xlane.xlu0 %1065
    %v1067 = vsel %vm644, %v1050, 0.0
    %1068 = vadd.xlane.f32.xlu0 %v1067
    %v1069 = vpop.xlane.xlu0 %1068
    %v1070 = vsel %vm644, %v1052, 0.0
    %1071 = vadd.xlane.f32.xlu0 %v1070
    %v1072 = vpop.xlane.xlu0 %1071
    %v1073 = vsel %vm644, %v1054, 0.0
    %1074 = vadd.xlane.f32.xlu0 %v1073
    %v1075 = vpop.xlane.xlu0 %1074
    %v1076 = vsel %vm644, %v1056, 0.0
    %1077 = vadd.xlane.f32.xlu0 %v1076
    %v1078 = vpop.xlane.xlu0 %1077
    %v1079 = vsel %vm644, %v1058, 0.0
    %1080 = vadd.xlane.f32.xlu0 %v1079
    %v1081 = vpop.xlane.xlu0 %1080
    %v1082 = vsel %vm644, %v1060, 0.0
    %1083 = vadd.xlane.f32.xlu0 %v1082
    %v1084 = vpop.xlane.xlu0 %1083
    %v1085 = vrcp.pop %v1063
    %v1086 = vrcp.pop %v1066
    %v1087 = vrcp.pop %v1069
    %v1088 = vrcp.pop %v1072
    %v1089 = vrcp.pop %v1075
    %v1090 = vrcp.pop %v1078
    %v1091 = vrcp.pop %v1081
    %v1092 = vrcp.pop %v1084
    %v1093 = vmul.f32 %v1046, %v1085
    %v1094 = vmul.f32 %v1048, %v1086
    %v1095 = vmul.f32 %v1050, %v1087
    %v1096 = vmul.f32 %v1052, %v1088
    %v1097 = vmul.f32 %v1054, %v1089
    %v1098 = vmul.f32 %v1056, %v1090
    %v1099 = vmul.f32 %v1058, %v1091
    %v1100 = vmul.f32 %v1060, %v1092
    %v1101 = vpack.c.bf16 %v1093, %v1093
    %v1102 = vpack.c.bf16 %v1094, %v1094
    %v1103 = vpack.c.bf16 %v1095, %v1095
    %v1104 = vpack.c.bf16 %v1096, %v1096
    %v1105 = vpack.c.bf16 %v1097, %v1097
    %v1106 = vpack.c.bf16 %v1098, %v1098
    %v1107 = vpack.c.bf16 %v1099, %v1099
    %v1108 = vpack.c.bf16 %v1100, %v1100
    %v1110 = vsel %vm644, %v1101, 0
    %vm1112 = vcmask 1043456
    %v1114 = vsel %vm1112, %v636, 0
    %1116 = vmatprep.subr.bf16.mxu0 0
    %1117 = vmatpush1.bf16.msra.mxu0 0
    %1118 = vmatprep.subr.bf16.mxu0 0
    %1119 = vmatpush1.bf16.msra.mxu0 0
    %1120 = vmatprep.subr.bf16.mxu0 0
    %1121 = vmatpush1.bf16.msra.mxu0 0
    %1122 = vmatprep.subr.bf16.mxu0 0
    %1123 = vmatpush1.bf16.msra.mxu0 0
    %1124 = vmatprep.subr.bf16.mxu0 0
    %1125 = vmatpush1.bf16.msra.mxu0 0
    %1126 = vmatprep.subr.bf16.mxu0 0
    %1127 = vmatpush1.bf16.msra.mxu0 0
    %1128 = vmatprep.subr.bf16.mxu0 0
    %1129 = vmatpush1.bf16.msra.mxu0 0
    %1130 = vmatprep.subr.bf16.mxu0 0
    %1131 = vmatpush1.bf16.msra.mxu0 %v1114
    %1132 = vmatprep.subr.bf16.mxu0 0
    %1133 = vmatpush2.bf16.msra.mxu0 0
    %1134 = vmatprep.subr.bf16.mxu0 0
    %1135 = vmatpush2.bf16.msra.mxu0 0
    %1136 = vmatprep.subr.bf16.mxu0 0
    %1137 = vmatpush2.bf16.msra.mxu0 0
    %1138 = vmatprep.subr.bf16.mxu0 0
    %1139 = vmatpush2.bf16.msra.mxu0 0
    %1140 = vmatprep.subr.bf16.mxu0 0
    %1141 = vmatpush2.bf16.msra.mxu0 0
    %1142 = vmatprep.subr.bf16.mxu0 0
    %1143 = vmatpush2.bf16.msra.mxu0 0
    %1144 = vmatprep.subr.bf16.mxu0 0
    %1145 = vmatpush2.bf16.msra.mxu0 0
    %1146 = vmatprep.subr.bf16.mxu0 0
    %1147 = vmatpush2.bf16.msra.mxu0 0
    %1148 = vmatprep.mubr.bf16.mxu0 0
    %1149 = vmatmul.mubr.bf16.gmra.mxu0 %v1110
    %v1150 = vpop.f32.mrf.mxu0
    %v1151 = vadd.f32 0.0, %v1150
    %v1152 = vpop.f32.mrf.mxu0
    %v1153 = vpop.f32.mrf.mxu0
    %v1154 = vpop.f32.mrf.mxu0
    %1155 = vdwg.mxu0
    %v1157 = vsel %vm644, %v1102, 0
    %v1160 = vsel %vm1112, %v637, 0
    %1162 = vmatprep.subr.bf16.mxu0 0
    %1163 = vmatpush1.bf16.msra.mxu0 0
    %1164 = vmatprep.subr.bf16.mxu0 0
    %1165 = vmatpush1.bf16.msra.mxu0 0
    %1166 = vmatprep.subr.bf16.mxu0 0
    %1167 = vmatpush1.bf16.msra.mxu0 0
    %1168 = vmatprep.subr.bf16.mxu0 0
    %1169 = vmatpush1.bf16.msra.mxu0 0
    %1170 = vmatprep.subr.bf16.mxu0 0
    %1171 = vmatpush1.bf16.msra.mxu0 0
    %1172 = vmatprep.subr.bf16.mxu0 0
    %1173 = vmatpush1.bf16.msra.mxu0 0
    %1174 = vmatprep.subr.bf16.mxu0 0
    %1175 = vmatpush1.bf16.msra.mxu0 0
    %1176 = vmatprep.subr.bf16.mxu0 0
    %1177 = vmatpush1.bf16.msra.mxu0 %v1160
    %1178 = vmatprep.subr.bf16.mxu0 0
    %1179 = vmatpush2.bf16.msra.mxu0 0
    %1180 = vmatprep.subr.bf16.mxu0 0
    %1181 = vmatpush2.bf16.msra.mxu0 0
    %1182 = vmatprep.subr.bf16.mxu0 0
    %1183 = vmatpush2.bf16.msra.mxu0 0
    %1184 = vmatprep.subr.bf16.mxu0 0
    %1185 = vmatpush2.bf16.msra.mxu0 0
    %1186 = vmatprep.subr.bf16.mxu0 0
    %1187 = vmatpush2.bf16.msra.mxu0 0
    %1188 = vmatprep.subr.bf16.mxu0 0
    %1189 = vmatpush2.bf16.msra.mxu0 0
    %1190 = vmatprep.subr.bf16.mxu0 0
    %1191 = vmatpush2.bf16.msra.mxu0 0
    %1192 = vmatprep.subr.bf16.mxu0 0
    %1193 = vmatpush2.bf16.msra.mxu0 0
    %1194 = vmatprep.mubr.bf16.mxu0 0
    %1195 = vmatmul.mubr.bf16.gmra.mxu0 %v1157
    %v1196 = vpop.f32.mrf.mxu0
    %v1197 = vadd.f32 0.0, %v1196
    %v1198 = vpop.f32.mrf.mxu0
    %v1199 = vpop.f32.mrf.mxu0
    %v1200 = vpop.f32.mrf.mxu0
    %1201 = vdwg.mxu0
    %v1203 = vsel %vm644, %v1103, 0
    %v1206 = vsel %vm1112, %v638, 0
    %1208 = vmatprep.subr.bf16.mxu0 0
    %1209 = vmatpush1.bf16.msra.mxu0 0
    %1210 = vmatprep.subr.bf16.mxu0 0
    %1211 = vmatpush1.bf16.msra.mxu0 0
    %1212 = vmatprep.subr.bf16.mxu0 0
    %1213 = vmatpush1.bf16.msra.mxu0 0
    %1214 = vmatprep.subr.bf16.mxu0 0
    %1215 = vmatpush1.bf16.msra.mxu0 0
    %1216 = vmatprep.subr.bf16.mxu0 0
    %1217 = vmatpush1.bf16.msra.mxu0 0
    %1218 = vmatprep.subr.bf16.mxu0 0
    %1219 = vmatpush1.bf16.msra.mxu0 0
    %1220 = vmatprep.subr.bf16.mxu0 0
    %1221 = vmatpush1.bf16.msra.mxu0 0
    %1222 = vmatprep.subr.bf16.mxu0 0
    %1223 = vmatpush1.bf16.msra.mxu0 %v1206
    %1224 = vmatprep.subr.bf16.mxu0 0
    %1225 = vmatpush2.bf16.msra.mxu0 0
    %1226 = vmatprep.subr.bf16.mxu0 0
    %1227 = vmatpush2.bf16.msra.mxu0 0
    %1228 = vmatprep.subr.bf16.mxu0 0
    %1229 = vmatpush2.bf16.msra.mxu0 0
    %1230 = vmatprep.subr.bf16.mxu0 0
    %1231 = vmatpush2.bf16.msra.mxu0 0
    %1232 = vmatprep.subr.bf16.mxu0 0
    %1233 = vmatpush2.bf16.msra.mxu0 0
    %1234 = vmatprep.subr.bf16.mxu0 0
    %1235 = vmatpush2.bf16.msra.mxu0 0
    %1236 = vmatprep.subr.bf16.mxu0 0
    %1237 = vmatpush2.bf16.msra.mxu0 0
    %1238 = vmatprep.subr.bf16.mxu0 0
    %1239 = vmatpush2.bf16.msra.mxu0 0
    %1240 = vmatprep.mubr.bf16.mxu0 0
    %1241 = vmatmul.mubr.bf16.gmra.mxu0 %v1203
    %v1242 = vpop.f32.mrf.mxu0
    %v1243 = vadd.f32 0.0, %v1242
    %v1244 = vpop.f32.mrf.mxu0
    %v1245 = vpop.f32.mrf.mxu0
    %v1246 = vpop.f32.mrf.mxu0
    %1247 = vdwg.mxu0
    %v1249 = vsel %vm644, %v1104, 0
    %v1252 = vsel %vm1112, %v639, 0
    %1254 = vmatprep.subr.bf16.mxu0 0
    %1255 = vmatpush1.bf16.msra.mxu0 0
    %1256 = vmatprep.subr.bf16.mxu0 0
    %1257 = vmatpush1.bf16.msra.mxu0 0
    %1258 = vmatprep.subr.bf16.mxu0 0
    %1259 = vmatpush1.bf16.msra.mxu0 0
    %1260 = vmatprep.subr.bf16.mxu0 0
    %1261 = vmatpush1.bf16.msra.mxu0 0
    %1262 = vmatprep.subr.bf16.mxu0 0
    %1263 = vmatpush1.bf16.msra.mxu0 0
    %1264 = vmatprep.subr.bf16.mxu0 0
    %1265 = vmatpush1.bf16.msra.mxu0 0
    %1266 = vmatprep.subr.bf16.mxu0 0
    %1267 = vmatpush1.bf16.msra.mxu0 0
    %1268 = vmatprep.subr.bf16.mxu0 0
    %1269 = vmatpush1.bf16.msra.mxu0 %v1252
    %1270 = vmatprep.subr.bf16.mxu0 0
    %1271 = vmatpush2.bf16.msra.mxu0 0
    %1272 = vmatprep.subr.bf16.mxu0 0
    %1273 = vmatpush2.bf16.msra.mxu0 0
    %1274 = vmatprep.subr.bf16.mxu0 0
    %1275 = vmatpush2.bf16.msra.mxu0 0
    %1276 = vmatprep.subr.bf16.mxu0 0
    %1277 = vmatpush2.bf16.msra.mxu0 0
    %1278 = vmatprep.subr.bf16.mxu0 0
    %1279 = vmatpush2.bf16.msra.mxu0 0
    %1280 = vmatprep.subr.bf16.mxu0 0
    %1281 = vmatpush2.bf16.msra.mxu0 0
    %1282 = vmatprep.subr.bf16.mxu0 0
    %1283 = vmatpush2.bf16.msra.mxu0 0
    %1284 = vmatprep.subr.bf16.mxu0 0
    %1285 = vmatpush2.bf16.msra.mxu0 0
    %1286 = vmatprep.mubr.bf16.mxu0 0
    %1287 = vmatmul.mubr.bf16.gmra.mxu0 %v1249
    %v1288 = vpop.f32.mrf.mxu0
    %v1289 = vadd.f32 0.0, %v1288
    %v1290 = vpop.f32.mrf.mxu0
    %v1291 = vpop.f32.mrf.mxu0
    %v1292 = vpop.f32.mrf.mxu0
    %1293 = vdwg.mxu0
    %v1295 = vsel %vm644, %v1105, 0
    %v1298 = vsel %vm1112, %v640, 0
    %1300 = vmatprep.subr.bf16.mxu0 0
    %1301 = vmatpush1.bf16.msra.mxu0 0
    %1302 = vmatprep.subr.bf16.mxu0 0
    %1303 = vmatpush1.bf16.msra.mxu0 0
    %1304 = vmatprep.subr.bf16.mxu0 0
    %1305 = vmatpush1.bf16.msra.mxu0 0
    %1306 = vmatprep.subr.bf16.mxu0 0
    %1307 = vmatpush1.bf16.msra.mxu0 0
    %1308 = vmatprep.subr.bf16.mxu0 0
    %1309 = vmatpush1.bf16.msra.mxu0 0
    %1310 = vmatprep.subr.bf16.mxu0 0
    %1311 = vmatpush1.bf16.msra.mxu0 0
    %1312 = vmatprep.subr.bf16.mxu0 0
    %1313 = vmatpush1.bf16.msra.mxu0 0
    %1314 = vmatprep.subr.bf16.mxu0 0
    %1315 = vmatpush1.bf16.msra.mxu0 %v1298
    %1316 = vmatprep.subr.bf16.mxu0 0
    %1317 = vmatpush2.bf16.msra.mxu0 0
    %1318 = vmatprep.subr.bf16.mxu0 0
    %1319 = vmatpush2.bf16.msra.mxu0 0
    %1320 = vmatprep.subr.bf16.mxu0 0
    %1321 = vmatpush2.bf16.msra.mxu0 0
    %1322 = vmatprep.subr.bf16.mxu0 0
    %1323 = vmatpush2.bf16.msra.mxu0 0
    %1324 = vmatprep.subr.bf16.mxu0 0
    %1325 = vmatpush2.bf16.msra.mxu0 0
    %1326 = vmatprep.subr.bf16.mxu0 0
    %1327 = vmatpush2.bf16.msra.mxu0 0
    %1328 = vmatprep.subr.bf16.mxu0 0
    %1329 = vmatpush2.bf16.msra.mxu0 0
    %1330 = vmatprep.subr.bf16.mxu0 0
    %1331 = vmatpush2.bf16.msra.mxu0 0
    %1332 = vmatprep.mubr.bf16.mxu0 0
    %1333 = vmatmul.mubr.bf16.gmra.mxu0 %v1295
    %v1334 = vpop.f32.mrf.mxu0
    %v1335 = vadd.f32 0.0, %v1334
    %v1336 = vpop.f32.mrf.mxu0
    %v1337 = vpop.f32.mrf.mxu0
    %v1338 = vpop.f32.mrf.mxu0
    %1339 = vdwg.mxu0
    %v1341 = vsel %vm644, %v1106, 0
    %v1344 = vsel %vm1112, %v641, 0
    %1346 = vmatprep.subr.bf16.mxu0 0
    %1347 = vmatpush1.bf16.msra.mxu0 0
    %1348 = vmatprep.subr.bf16.mxu0 0
    %1349 = vmatpush1.bf16.msra.mxu0 0
    %1350 = vmatprep.subr.bf16.mxu0 0
    %1351 = vmatpush1.bf16.msra.mxu0 0
    %1352 = vmatprep.subr.bf16.mxu0 0
    %1353 = vmatpush1.bf16.msra.mxu0 0
    %1354 = vmatprep.subr.bf16.mxu0 0
    %1355 = vmatpush1.bf16.msra.mxu0 0
    %1356 = vmatprep.subr.bf16.mxu0 0
    %1357 = vmatpush1.bf16.msra.mxu0 0
    %1358 = vmatprep.subr.bf16.mxu0 0
    %1359 = vmatpush1.bf16.msra.mxu0 0
    %1360 = vmatprep.subr.bf16.mxu0 0
    %1361 = vmatpush1.bf16.msra.mxu0 %v1344
    %1362 = vmatprep.subr.bf16.mxu0 0
    %1363 = vmatpush2.bf16.msra.mxu0 0
    %1364 = vmatprep.subr.bf16.mxu0 0
    %1365 = vmatpush2.bf16.msra.mxu0 0
    %1366 = vmatprep.subr.bf16.mxu0 0
    %1367 = vmatpush2.bf16.msra.mxu0 0
    %1368 = vmatprep.subr.bf16.mxu0 0
    %1369 = vmatpush2.bf16.msra.mxu0 0
    %1370 = vmatprep.subr.bf16.mxu0 0
    %1371 = vmatpush2.bf16.msra.mxu0 0
    %1372 = vmatprep.subr.bf16.mxu0 0
    %1373 = vmatpush2.bf16.msra.mxu0 0
    %1374 = vmatprep.subr.bf16.mxu0 0
    %1375 = vmatpush2.bf16.msra.mxu0 0
    %1376 = vmatprep.subr.bf16.mxu0 0
    %1377 = vmatpush2.bf16.msra.mxu0 0
    %1378 = vmatprep.mubr.bf16.mxu0 0
    %1379 = vmatmul.mubr.bf16.gmra.mxu0 %v1341
    %v1380 = vpop.f32.mrf.mxu0
    %v1381 = vadd.f32 0.0, %v1380
    %v1382 = vpop.f32.mrf.mxu0
    %v1383 = vpop.f32.mrf.mxu0
    %v1384 = vpop.f32.mrf.mxu0
    %1385 = vdwg.mxu0
    %v1387 = vsel %vm644, %v1107, 0
    %v1390 = vsel %vm1112, %v642, 0
    %1392 = vmatprep.subr.bf16.mxu0 0
    %1393 = vmatpush1.bf16.msra.mxu0 0
    %1394 = vmatprep.subr.bf16.mxu0 0
    %1395 = vmatpush1.bf16.msra.mxu0 0
    %1396 = vmatprep.subr.bf16.mxu0 0
    %1397 = vmatpush1.bf16.msra.mxu0 0
    %1398 = vmatprep.subr.bf16.mxu0 0
    %1399 = vmatpush1.bf16.msra.mxu0 0
    %1400 = vmatprep.subr.bf16.mxu0 0
    %1401 = vmatpush1.bf16.msra.mxu0 0
    %1402 = vmatprep.subr.bf16.mxu0 0
    %1403 = vmatpush1.bf16.msra.mxu0 0
    %1404 = vmatprep.subr.bf16.mxu0 0
    %1405 = vmatpush1.bf16.msra.mxu0 0
    %1406 = vmatprep.subr.bf16.mxu0 0
    %1407 = vmatpush1.bf16.msra.mxu0 %v1390
    %1408 = vmatprep.subr.bf16.mxu0 0
    %1409 = vmatpush2.bf16.msra.mxu0 0
    %1410 = vmatprep.subr.bf16.mxu0 0
    %1411 = vmatpush2.bf16.msra.mxu0 0
    %1412 = vmatprep.subr.bf16.mxu0 0
    %1413 = vmatpush2.bf16.msra.mxu0 0
    %1414 = vmatprep.subr.bf16.mxu0 0
    %1415 = vmatpush2.bf16.msra.mxu0 0
    %1416 = vmatprep.subr.bf16.mxu0 0
    %1417 = vmatpush2.bf16.msra.mxu0 0
    %1418 = vmatprep.subr.bf16.mxu0 0
    %1419 = vmatpush2.bf16.msra.mxu0 0
    %1420 = vmatprep.subr.bf16.mxu0 0
    %1421 = vmatpush2.bf16.msra.mxu0 0
    %1422 = vmatprep.subr.bf16.mxu0 0
    %1423 = vmatpush2.bf16.msra.mxu0 0
    %1424 = vmatprep.mubr.bf16.mxu0 0
    %1425 = vmatmul.mubr.bf16.gmra.mxu0 %v1387
    %v1426 = vpop.f32.mrf.mxu0
    %v1427 = vadd.f32 0.0, %v1426
    %v1428 = vpop.f32.mrf.mxu0
    %v1429 = vpop.f32.mrf.mxu0
    %v1430 = vpop.f32.mrf.mxu0
    %1431 = vdwg.mxu0
    %v1433 = vsel %vm644, %v1108, 0
    %v1436 = vsel %vm1112, %v643, 0
    %1438 = vmatprep.subr.bf16.mxu0 0
    %1439 = vmatpush1.bf16.msra.mxu0 0
    %1440 = vmatprep.subr.bf16.mxu0 0
    %1441 = vmatpush1.bf16.msra.mxu0 0
    %1442 = vmatprep.subr.bf16.mxu0 0
    %1443 = vmatpush1.bf16.msra.mxu0 0
    %1444 = vmatprep.subr.bf16.mxu0 0
    %1445 = vmatpush1.bf16.msra.mxu0 0
    %1446 = vmatprep.subr.bf16.mxu0 0
    %1447 = vmatpush1.bf16.msra.mxu0 0
    %1448 = vmatprep.subr.bf16.mxu0 0
    %1449 = vmatpush1.bf16.msra.mxu0 0
    %1450 = vmatprep.subr.bf16.mxu0 0
    %1451 = vmatpush1.bf16.msra.mxu0 0
    %1452 = vmatprep.subr.bf16.mxu0 0
    %1453 = vmatpush1.bf16.msra.mxu0 %v1436
    %1454 = vmatprep.subr.bf16.mxu0 0
    %1455 = vmatpush2.bf16.msra.mxu0 0
    %1456 = vmatprep.subr.bf16.mxu0 0
    %1457 = vmatpush2.bf16.msra.mxu0 0
    %1458 = vmatprep.subr.bf16.mxu0 0
    %1459 = vmatpush2.bf16.msra.mxu0 0
    %1460 = vmatprep.subr.bf16.mxu0 0
    %1461 = vmatpush2.bf16.msra.mxu0 0
    %1462 = vmatprep.subr.bf16.mxu0 0
    %1463 = vmatpush2.bf16.msra.mxu0 0
    %1464 = vmatprep.subr.bf16.mxu0 0
    %1465 = vmatpush2.bf16.msra.mxu0 0
    %1466 = vmatprep.subr.bf16.mxu0 0
    %1467 = vmatpush2.bf16.msra.mxu0 0
    %1468 = vmatprep.subr.bf16.mxu0 0
    %1469 = vmatpush2.bf16.msra.mxu0 0
    %1470 = vmatprep.mubr.bf16.mxu0 0
    %1471 = vmatmul.mubr.bf16.gmra.mxu0 %v1433
    %v1472 = vpop.f32.mrf.mxu0
    %v1473 = vadd.f32 0.0, %v1472
    %v1474 = vpop.f32.mrf.mxu0
    %v1475 = vpop.f32.mrf.mxu0
    %v1476 = vpop.f32.mrf.mxu0
    %1477 = vdwg.mxu0
    %v1478 = vpack.c.bf16 %v1151, %v1151
    %v1479 = vpack.c.bf16 %v1197, %v1197
    %v1480 = vpack.c.bf16 %v1243, %v1243
    %v1481 = vpack.c.bf16 %v1289, %v1289
    %v1482 = vpack.c.bf16 %v1335, %v1335
    %v1483 = vpack.c.bf16 %v1381, %v1381
    %v1484 = vpack.c.bf16 %v1427, %v1427
    %v1485 = vpack.c.bf16 %v1473, %v1473
    %v1488 = vunpack.c.l.b16 %v1478
    %v1489 = vunpack.c.l.b16 %v1479
    %v1490 = vpack.c.b16 %v1489, %v1488
    %v1493 = vunpack.c.l.b16 %v1480
    %v1494 = vunpack.c.l.b16 %v1481
    %v1495 = vpack.c.b16 %v1494, %v1493
    %1496 = vrot.lane.b32.xlu0 %v1495, 8
    %v1497 = vpop.permute.xlu0 %1496
    %v1500 = vunpack.c.l.b16 %v1482
    %v1501 = vunpack.c.l.b16 %v1483
    %v1502 = vpack.c.b16 %v1501, %v1500
    %1503 = vrot.lane.b32.xlu0 %v1502, 16
    %v1504 = vpop.permute.xlu0 %1503
    %v1507 = vunpack.c.l.b16 %v1484
    %v1508 = vunpack.c.l.b16 %v1485
    %v1509 = vpack.c.b16 %v1508, %v1507
    %1510 = vrot.lane.b32.xlu0 %v1509, 24
    %v1511 = vpop.permute.xlu0 %1510
    %v1514 = vsel %vm644, %v1490, %v1497
    %vm1515 = vcmask 130048
    %v1517 = vsel %vm1515, %v1514, %v1504
    %vm1518 = vcmask 195584
    %v1520 = vsel %vm1518, %v1517, %v1511
    %v1521 = vld [vmem:[#allocation11] sm:$0xf]
    %v1522 = vld [vmem:[#allocation11 + $0x4] sm:$0xf]
    %v1523 = vld [vmem:[#allocation11 + $0x8] sm:$0xf]
    %v1524 = vld [vmem:[#allocation11 + $0xc] sm:$0xf]
    %v1525 = vld [vmem:[#allocation13] sm:$0x1]
    %v1527 = vlaneseq
    %v1528 = vshrl.u32 %v1527, 7
    %v1529 = vsub.s32 0, %v1528
    %v1530 = vrot.slane %v1525, %v1529
    %v1536 = vunpack.c.l.b16 %v1521
    %v1537 = vunpack.c.l.b16 %v1522
    %v1538 = vunpack.c.l.b16 %v1523
    %v1539 = vunpack.c.l.b16 %v1524
    %v1540 = vpack.c.b16 %v1537, %v1536
    %v1541 = vpack.c.b16 %v1539, %v1538
    %v1544 = vsel %vm335, %v1520, 0
    %1546 = vmatprep.subr.bf16.mxu0 0
    %1547 = vmatpush1.bf16.msra.mxu0 0
    %1548 = vmatprep.subr.bf16.mxu0 0
    %1549 = vmatpush1.bf16.msra.mxu0 0
    %1550 = vmatprep.subr.bf16.mxu0 0
    %1551 = vmatpush1.bf16.msra.mxu0 0
    %1552 = vmatprep.subr.bf16.mxu0 0
    %1553 = vmatpush1.bf16.msra.mxu0 0
    %1554 = vmatprep.subr.bf16.mxu0 0
    %1555 = vmatpush1.bf16.msra.mxu0 0
    %1556 = vmatprep.subr.bf16.mxu0 0
    %1557 = vmatpush1.bf16.msra.mxu0 0
    %1558 = vmatprep.subr.bf16.mxu0 0
    %1559 = vmatpush1.bf16.msra.mxu0 %v1541
    %1560 = vmatprep.subr.bf16.mxu0 0
    %1561 = vmatpush1.bf16.msra.mxu0 %v1540
    %1562 = vmatprep.subr.bf16.mxu0 0
    %1563 = vmatpush2.bf16.msra.mxu0 0
    %1564 = vmatprep.subr.bf16.mxu0 0
    %1565 = vmatpush2.bf16.msra.mxu0 0
    %1566 = vmatprep.subr.bf16.mxu0 0
    %1567 = vmatpush2.bf16.msra.mxu0 0
    %1568 = vmatprep.subr.bf16.mxu0 0
    %1569 = vmatpush2.bf16.msra.mxu0 0
    %1570 = vmatprep.subr.bf16.mxu0 0
    %1571 = vmatpush2.bf16.msra.mxu0 0
    %1572 = vmatprep.subr.bf16.mxu0 0
    %1573 = vmatpush2.bf16.msra.mxu0 0
    %1574 = vmatprep.subr.bf16.mxu0 0
    %1575 = vmatpush2.bf16.msra.mxu0 0
    %1576 = vmatprep.subr.bf16.mxu0 0
    %1577 = vmatpush2.bf16.msra.mxu0 0
    %1578 = vmatprep.mubr.bf16.mxu0 0
    %1579 = vmatmul.mubr.bf16.gmra.mxu0 %v1544
    %v1580 = vpop.f32.mrf.mxu0
    %v1581 = vadd.f32 %v1530, %v1580
    %v1582 = vpop.f32.mrf.mxu0
    %v1583 = vpop.f32.mrf.mxu0
    %v1584 = vadd.f32 %v1530, %v1583
    %v1585 = vpop.f32.mrf.mxu0
    %1586 = vdwg.mxu0
    %v1589 = vrot.slane %v1581, 1
    %v1590 = vrot.slane %v1581, 2
    %v1591 = vrot.slane %v1581, 3
    %v1592 = vrot.slane %v1581, 4
    %v1593 = vrot.slane %v1581, 5
    %v1594 = vrot.slane %v1581, 6
    %v1595 = vrot.slane %v1581, 7
    %v1596 = vrot.slane %v1584, 1
    %v1597 = vrot.slane %v1584, 2
    %v1598 = vrot.slane %v1584, 3
    %v1599 = vrot.slane %v1584, 4
    %v1600 = vrot.slane %v1584, 5
    %v1601 = vrot.slane %v1584, 6
    %v1602 = vrot.slane %v1584, 7
    %v1619 = vadd.f32 %v148, %v1581
    %v1620 = vadd.f32 %v149, %v1589
    %v1621 = vadd.f32 %v150, %v1590
    %v1622 = vadd.f32 %v151, %v1591
    %v1623 = vadd.f32 %v152, %v1592
    %v1624 = vadd.f32 %v153, %v1593
    %v1625 = vadd.f32 %v154, %v1594
    %v1626 = vadd.f32 %v155, %v1595
    %v1627 = vadd.f32 %v164, %v1584
    %v1628 = vadd.f32 %v165, %v1596
    %v1629 = vadd.f32 %v166, %v1597
    %v1630 = vadd.f32 %v167, %v1598
    %v1631 = vadd.f32 %v168, %v1599
    %v1632 = vadd.f32 %v169, %v1600
    %v1633 = vadd.f32 %v170, %v1601
    %v1634 = vadd.f32 %v171, %v1602
    %v1635 = vld [vmem:[%s10] sm:$0x1]
    %v1636 = vld [vmem:[%s11] sm:$0x1]
    %v1653 = vrot.slane %v1620, 7
    %v1654 = vsel %vm288, %v1653, %v1619
    %v1655 = vrot.slane %v1621, 6
    %v1656 = vsel %vm291, %v1655, %v1654
    %v1657 = vrot.slane %v1622, 5
    %v1658 = vsel %vm294, %v1657, %v1656
    %v1659 = vrot.slane %v1623, 4
    %v1660 = vsel %vm297, %v1659, %v1658
    %v1661 = vrot.slane %v1624, 3
    %v1662 = vsel %vm300, %v1661, %v1660
    %v1663 = vrot.slane %v1625, 2
    %v1664 = vsel %vm303, %v1663, %v1662
    %v1665 = vrot.slane %v1626, 1
    %v1666 = vsel %vm306, %v1665, %v1664
    %v1667 = vrot.slane %v1628, 7
    %v1668 = vsel %vm288, %v1667, %v1627
    %v1669 = vrot.slane %v1629, 6
    %v1670 = vsel %vm291, %v1669, %v1668
    %v1671 = vrot.slane %v1630, 5
    %v1672 = vsel %vm294, %v1671, %v1670
    %v1673 = vrot.slane %v1631, 4
    %v1674 = vsel %vm297, %v1673, %v1672
    %v1675 = vrot.slane %v1632, 3
    %v1676 = vsel %vm300, %v1675, %v1674
    %v1677 = vrot.slane %v1633, 2
    %v1678 = vsel %vm303, %v1677, %v1676
    %v1679 = vrot.slane %v1634, 1
    %v1680 = vsel %vm306, %v1679, %v1678
    %v1683 = vsel %vm335, %v1666, 0.0
    %1684 = vadd.xlane.f32.xlu0 %v1683
    %v1685 = vpop.xlane.xlu0 %1684
    %v1686 = vsel %vm335, %v1680, 0.0
    %1687 = vadd.xlane.f32.xlu0 %v1686
    %v1688 = vpop.xlane.xlu0 %1687
    %v1689 = vrcp.pop 32.0
    %v1690 = vmul.f32 %v1685, %v1689
    %v1691 = vmul.f32 %v1688, %v1689
    %v1694 = vrot.slane %v1690, 1
    %v1695 = vrot.slane %v1690, 2
    %v1696 = vrot.slane %v1690, 3
    %v1697 = vrot.slane %v1690, 4
    %v1698 = vrot.slane %v1690, 5
    %v1699 = vrot.slane %v1690, 6
    %v1700 = vrot.slane %v1690, 7
    %v1701 = vrot.slane %v1691, 1
    %v1702 = vrot.slane %v1691, 2
    %v1703 = vrot.slane %v1691, 3
    %v1704 = vrot.slane %v1691, 4
    %v1705 = vrot.slane %v1691, 5
    %v1706 = vrot.slane %v1691, 6
    %v1707 = vrot.slane %v1691, 7
    %v1724 = vsub.f32 %v1619, %v1690
    %v1725 = vsub.f32 %v1620, %v1694
    %v1726 = vsub.f32 %v1621, %v1695
    %v1727 = vsub.f32 %v1622, %v1696
    %v1728 = vsub.f32 %v1623, %v1697
    %v1729 = vsub.f32 %v1624, %v1698
    %v1730 = vsub.f32 %v1625, %v1699
    %v1731 = vsub.f32 %v1626, %v1700
    %v1732 = vsub.f32 %v1627, %v1691
    %v1733 = vsub.f32 %v1628, %v1701
    %v1734 = vsub.f32 %v1629, %v1702
    %v1735 = vsub.f32 %v1630, %v1703
    %v1736 = vsub.f32 %v1631, %v1704
    %v1737 = vsub.f32 %v1632, %v1705
    %v1738 = vsub.f32 %v1633, %v1706
    %v1739 = vsub.f32 %v1634, %v1707
    %v1740 = vmul.f32 %v1724, %v1724
    %v1741 = vmul.f32 %v1725, %v1725
    %v1742 = vmul.f32 %v1726, %v1726
    %v1743 = vmul.f32 %v1727, %v1727
    %v1744 = vmul.f32 %v1728, %v1728
    %v1745 = vmul.f32 %v1729, %v1729
    %v1746 = vmul.f32 %v1730, %v1730
    %v1747 = vmul.f32 %v1731, %v1731
    %v1748 = vmul.f32 %v1732, %v1732
    %v1749 = vmul.f32 %v1733, %v1733
    %v1750 = vmul.f32 %v1734, %v1734
    %v1751 = vmul.f32 %v1735, %v1735
    %v1752 = vmul.f32 %v1736, %v1736
    %v1753 = vmul.f32 %v1737, %v1737
    %v1754 = vmul.f32 %v1738, %v1738
    %v1755 = vmul.f32 %v1739, %v1739
    %v1772 = vrot.slane %v1741, 7
    %v1773 = vsel %vm288, %v1772, %v1740
    %v1774 = vrot.slane %v1742, 6
    %v1775 = vsel %vm291, %v1774, %v1773
    %v1776 = vrot.slane %v1743, 5
    %v1777 = vsel %vm294, %v1776, %v1775
    %v1778 = vrot.slane %v1744, 4
    %v1779 = vsel %vm297, %v1778, %v1777
    %v1780 = vrot.slane %v1745, 3
    %v1781 = vsel %vm300, %v1780, %v1779
    %v1782 = vrot.slane %v1746, 2
    %v1783 = vsel %vm303, %v1782, %v1781
    %v1784 = vrot.slane %v1747, 1
    %v1785 = vsel %vm306, %v1784, %v1783
    %v1786 = vrot.slane %v1749, 7
    %v1787 = vsel %vm288, %v1786, %v1748
    %v1788 = vrot.slane %v1750, 6
    %v1789 = vsel %vm291, %v1788, %v1787
    %v1790 = vrot.slane %v1751, 5
    %v1791 = vsel %vm294, %v1790, %v1789
    %v1792 = vrot.slane %v1752, 4
    %v1793 = vsel %vm297, %v1792, %v1791
    %v1794 = vrot.slane %v1753, 3
    %v1795 = vsel %vm300, %v1794, %v1793
    %v1796 = vrot.slane %v1754, 2
    %v1797 = vsel %vm303, %v1796, %v1795
    %v1798 = vrot.slane %v1755, 1
    %v1799 = vsel %vm306, %v1798, %v1797
    %v1802 = vsel %vm335, %v1785, 0.0
    %1803 = vadd.xlane.f32.xlu0 %v1802
    %v1804 = vpop.xlane.xlu0 %1803
    %v1805 = vsel %vm335, %v1799, 0.0
    %1806 = vadd.xlane.f32.xlu0 %v1805
    %v1807 = vpop.xlane.xlu0 %1806
    %v1808 = vmul.f32 %v1804, %v1689
    %v1809 = vmul.f32 %v1807, %v1689
    %v1810 = vadd.f32 %v1808, 1e-05
    %v1811 = vadd.f32 %v1809, 1e-05
    %v1812 = vrsqrt.pop %v1810
    %v1813 = vrsqrt.pop %v1811
    %v1816 = vrot.slane %v1812, 1
    %v1817 = vrot.slane %v1812, 2
    %v1818 = vrot.slane %v1812, 3
    %v1819 = vrot.slane %v1812, 4
    %v1820 = vrot.slane %v1812, 5
    %v1821 = vrot.slane %v1812, 6
    %v1822 = vrot.slane %v1812, 7
    %v1823 = vrot.slane %v1813, 1
    %v1824 = vrot.slane %v1813, 2
    %v1825 = vrot.slane %v1813, 3
    %v1826 = vrot.slane %v1813, 4
    %v1827 = vrot.slane %v1813, 5
    %v1828 = vrot.slane %v1813, 6
    %v1829 = vrot.slane %v1813, 7
    %v1846 = vmul.f32 %v1724, %v1812
    %v1847 = vmul.f32 %v1725, %v1816
    %v1848 = vmul.f32 %v1726, %v1817
    %v1849 = vmul.f32 %v1727, %v1818
    %v1850 = vmul.f32 %v1728, %v1819
    %v1851 = vmul.f32 %v1729, %v1820
    %v1852 = vmul.f32 %v1730, %v1821
    %v1853 = vmul.f32 %v1731, %v1822
    %v1854 = vmul.f32 %v1732, %v1813
    %v1855 = vmul.f32 %v1733, %v1823
    %v1856 = vmul.f32 %v1734, %v1824
    %v1857 = vmul.f32 %v1735, %v1825
    %v1858 = vmul.f32 %v1736, %v1826
    %v1859 = vmul.f32 %v1737, %v1827
    %v1860 = vmul.f32 %v1738, %v1828
    %v1861 = vmul.f32 %v1739, %v1829
    %v1863 = vlaneseq
    %v1864 = vshrl.u32 %v1863, 7
    %v1865 = vsub.s32 0, %v1864
    %v1866 = vrot.slane %v1635, %v1865
    %v1868 = vmul.f32 %v1846, %v1866
    %v1869 = vmul.f32 %v1847, %v1866
    %v1870 = vmul.f32 %v1848, %v1866
    %v1871 = vmul.f32 %v1849, %v1866
    %v1872 = vmul.f32 %v1850, %v1866
    %v1873 = vmul.f32 %v1851, %v1866
    %v1874 = vmul.f32 %v1852, %v1866
    %v1875 = vmul.f32 %v1853, %v1866
    %v1876 = vmul.f32 %v1854, %v1866
    %v1877 = vmul.f32 %v1855, %v1866
    %v1878 = vmul.f32 %v1856, %v1866
    %v1879 = vmul.f32 %v1857, %v1866
    %v1880 = vmul.f32 %v1858, %v1866
    %v1881 = vmul.f32 %v1859, %v1866
    %v1882 = vmul.f32 %v1860, %v1866
    %v1883 = vmul.f32 %v1861, %v1866
    %v1885 = vlaneseq
    %v1886 = vshrl.u32 %v1885, 7
    %v1887 = vsub.s32 0, %v1886
    %v1888 = vrot.slane %v1636, %v1887
    %v1890 = vadd.f32 %v1868, %v1888
    %v1891 = vadd.f32 %v1869, %v1888
    %v1892 = vadd.f32 %v1870, %v1888
    %v1893 = vadd.f32 %v1871, %v1888
    %v1894 = vadd.f32 %v1872, %v1888
    %v1895 = vadd.f32 %v1873, %v1888
    %v1896 = vadd.f32 %v1874, %v1888
    %v1897 = vadd.f32 %v1875, %v1888
    %v1898 = vadd.f32 %v1876, %v1888
    %v1899 = vadd.f32 %v1877, %v1888
    %v1900 = vadd.f32 %v1878, %v1888
    %v1901 = vadd.f32 %v1879, %v1888
    %v1902 = vadd.f32 %v1880, %v1888
    %v1903 = vadd.f32 %v1881, %v1888
    %v1904 = vadd.f32 %v1882, %v1888
    %v1905 = vadd.f32 %v1883, %v1888
    %v1906 = vpack.c.bf16 %v1890, %v1890
    %v1907 = vpack.c.bf16 %v1891, %v1891
    %v1908 = vpack.c.bf16 %v1892, %v1892
    %v1909 = vpack.c.bf16 %v1893, %v1893
    %v1910 = vpack.c.bf16 %v1894, %v1894
    %v1911 = vpack.c.bf16 %v1895, %v1895
    %v1912 = vpack.c.bf16 %v1896, %v1896
    %v1913 = vpack.c.bf16 %v1897, %v1897
    %v1914 = vpack.c.bf16 %v1898, %v1898
    %v1915 = vpack.c.bf16 %v1899, %v1899
    %v1916 = vpack.c.bf16 %v1900, %v1900
    %v1917 = vpack.c.bf16 %v1901, %v1901
    %v1918 = vpack.c.bf16 %v1902, %v1902
    %v1919 = vpack.c.bf16 %v1903, %v1903
    %v1920 = vpack.c.bf16 %v1904, %v1904
    %v1921 = vpack.c.bf16 %v1905, %v1905
    %v1922 = vld [vmem:[%s12] sm:$0xf]
    %v1923 = vld [vmem:[%s12 + $0x4] sm:$0xf]
    %v1924 = vld [vmem:[%s12 + $0x8] sm:$0xf]
    %v1925 = vld [vmem:[%s12 + $0xc] sm:$0xf]
    %v1926 = vld [vmem:[%s13] sm:$0x1]
    %v1928 = vlaneseq
    %v1929 = vshrl.u32 %v1928, 7
    %v1930 = vsub.s32 0, %v1929
    %v1931 = vrot.slane %v1926, %v1930
    %v1949 = vunpack.c.l.b16 %v1906
    %v1950 = vunpack.c.l.b16 %v1907
    %v1951 = vunpack.c.l.b16 %v1908
    %v1952 = vunpack.c.l.b16 %v1909
    %v1953 = vunpack.c.l.b16 %v1910
    %v1954 = vunpack.c.l.b16 %v1911
    %v1955 = vunpack.c.l.b16 %v1912
    %v1956 = vunpack.c.l.b16 %v1913
    %v1957 = vunpack.c.l.b16 %v1914
    %v1958 = vunpack.c.l.b16 %v1915
    %v1959 = vunpack.c.l.b16 %v1916
    %v1960 = vunpack.c.l.b16 %v1917
    %v1961 = vunpack.c.l.b16 %v1918
    %v1962 = vunpack.c.l.b16 %v1919
    %v1963 = vunpack.c.l.b16 %v1920
    %v1964 = vunpack.c.l.b16 %v1921
    %v1965 = vrot.slane %v1950, 7
    %v1966 = vsel %vm288, %v1965, %v1949
    %v1967 = vrot.slane %v1951, 6
    %v1968 = vsel %vm291, %v1967, %v1966
    %v1969 = vrot.slane %v1952, 5
    %v1970 = vsel %vm294, %v1969, %v1968
    %v1971 = vrot.slane %v1953, 4
    %v1972 = vsel %vm297, %v1971, %v1970
    %v1973 = vrot.slane %v1954, 3
    %v1974 = vsel %vm300, %v1973, %v1972
    %v1975 = vrot.slane %v1955, 2
    %v1976 = vsel %vm303, %v1975, %v1974
    %v1977 = vrot.slane %v1956, 1
    %v1978 = vsel %vm306, %v1977, %v1976
    %v1979 = vrot.slane %v1958, 7
    %v1980 = vsel %vm288, %v1979, %v1957
    %v1981 = vrot.slane %v1959, 6
    %v1982 = vsel %vm291, %v1981, %v1980
    %v1983 = vrot.slane %v1960, 5
    %v1984 = vsel %vm294, %v1983, %v1982
    %v1985 = vrot.slane %v1961, 4
    %v1986 = vsel %vm297, %v1985, %v1984
    %v1987 = vrot.slane %v1962, 3
    %v1988 = vsel %vm300, %v1987, %v1986
    %v1989 = vrot.slane %v1963, 2
    %v1990 = vsel %vm303, %v1989, %v1988
    %v1991 = vrot.slane %v1964, 1
    %v1992 = vsel %vm306, %v1991, %v1990
    %v1993 = vpack.c.b16 %v1992, %v1978
    %v1998 = vunpack.c.l.b16 %v1922
    %v1999 = vunpack.c.l.b16 %v1923
    %v2000 = vunpack.c.l.b16 %v1924
    %v2001 = vunpack.c.l.b16 %v1925
    %v2002 = vpack.c.b16 %v1999, %v1998
    %v2003 = vpack.c.b16 %v2001, %v2000
    %v2007 = vsel %vm335, %v1993, 0
    %2009 = vmatprep.subr.bf16.mxu0 0
    %2010 = vmatpush1.bf16.msra.mxu0 0
    %2011 = vmatprep.subr.bf16.mxu0 0
    %2012 = vmatpush1.bf16.msra.mxu0 0
    %2013 = vmatprep.subr.bf16.mxu0 0
    %2014 = vmatpush1.bf16.msra.mxu0 0
    %2015 = vmatprep.subr.bf16.mxu0 0
    %2016 = vmatpush1.bf16.msra.mxu0 0
    %2017 = vmatprep.subr.bf16.mxu0 0
    %2018 = vmatpush1.bf16.msra.mxu0 0
    %2019 = vmatprep.subr.bf16.mxu0 0
    %2020 = vmatpush1.bf16.msra.mxu0 0
    %2021 = vmatprep.subr.bf16.mxu0 0
    %2022 = vmatpush1.bf16.msra.mxu0 %v2003
    %2023 = vmatprep.subr.bf16.mxu0 0
    %2024 = vmatpush1.bf16.msra.mxu0 %v2002
    %2025 = vmatprep.subr.bf16.mxu0 0
    %2026 = vmatpush2.bf16.msra.mxu0 0
    %2027 = vmatprep.subr.bf16.mxu0 0
    %2028 = vmatpush2.bf16.msra.mxu0 0
    %2029 = vmatprep.subr.bf16.mxu0 0
    %2030 = vmatpush2.bf16.msra.mxu0 0
    %2031 = vmatprep.subr.bf16.mxu0 0
    %2032 = vmatpush2.bf16.msra.mxu0 0
    %2033 = vmatprep.subr.bf16.mxu0 0
    %2034 = vmatpush2.bf16.msra.mxu0 0
    %2035 = vmatprep.subr.bf16.mxu0 0
    %2036 = vmatpush2.bf16.msra.mxu0 0
    %2037 = vmatprep.subr.bf16.mxu0 0
    %2038 = vmatpush2.bf16.msra.mxu0 0
    %2039 = vmatprep.subr.bf16.mxu0 0
    %2040 = vmatpush2.bf16.msra.mxu0 0
    %2041 = vmatprep.mubr.bf16.mxu0 0
    %2042 = vmatmul.mubr.bf16.gmra.mxu0 %v2007
    %v2043 = vpop.f32.mrf.mxu0
    %v2044 = vadd.f32 %v1931, %v2043
    %v2045 = vpop.f32.mrf.mxu0
    %v2046 = vpop.f32.mrf.mxu0
    %v2047 = vadd.f32 %v1931, %v2046
    %v2048 = vpop.f32.mrf.mxu0
    %2049 = vdwg.mxu0
    %v2050 = vmax.f32 %v2044, 0.0
    %v2051 = vmax.f32 %v2047, 0.0
    %v2052 = vpack.c.bf16 %v2051, %v2050
    %v2053 = vld [vmem:[%s14] sm:$0xf]
    %v2054 = vld [vmem:[%s14 + $0x4] sm:$0xf]
    %v2055 = vld [vmem:[%s14 + $0x8] sm:$0xf]
    %v2056 = vld [vmem:[%s14 + $0xc] sm:$0xf]
    %v2057 = vld [vmem:[%s14 + $0x10] sm:$0xf]
    %v2058 = vld [vmem:[%s14 + $0x14] sm:$0xf]
    %v2059 = vld [vmem:[%s14 + $0x18] sm:$0xf]
    %v2060 = vld [vmem:[%s14 + $0x1c] sm:$0xf]
    %v2061 = vld [vmem:[%s15] sm:$0x1]
    %v2063 = vlaneseq
    %v2064 = vshrl.u32 %v2063, 7
    %v2065 = vsub.s32 0, %v2064
    %v2066 = vrot.slane %v2061, %v2065
    %v2076 = vunpack.c.l.b16 %v2053
    %v2077 = vunpack.c.l.b16 %v2054
    %v2078 = vunpack.c.l.b16 %v2055
    %v2079 = vunpack.c.l.b16 %v2056
    %v2080 = vunpack.c.l.b16 %v2057
    %v2081 = vunpack.c.l.b16 %v2058
    %v2082 = vunpack.c.l.b16 %v2059
    %v2083 = vunpack.c.l.b16 %v2060
    %v2084 = vpack.c.b16 %v2077, %v2076
    %v2085 = vpack.c.b16 %v2079, %v2078
    %v2086 = vpack.c.b16 %v2081, %v2080
    %v2087 = vpack.c.b16 %v2083, %v2082
    %vm2092 = vcmask 523264
    %v2094 = vsel %vm2092, %v2052, 0
    %2096 = vmatprep.subr.bf16.mxu0 0
    %2097 = vmatpush1.bf16.msra.mxu0 0
    %2098 = vmatprep.subr.bf16.mxu0 0
    %2099 = vmatpush1.bf16.msra.mxu0 0
    %2100 = vmatprep.subr.bf16.mxu0 0
    %2101 = vmatpush1.bf16.msra.mxu0 0
    %2102 = vmatprep.subr.bf16.mxu0 0
    %2103 = vmatpush1.bf16.msra.mxu0 0
    %2104 = vmatprep.subr.bf16.mxu0 0
    %2105 = vmatpush1.bf16.msra.mxu0 %v2087
    %2106 = vmatprep.subr.bf16.mxu0 0
    %2107 = vmatpush1.bf16.msra.mxu0 %v2086
    %2108 = vmatprep.subr.bf16.mxu0 0
    %2109 = vmatpush1.bf16.msra.mxu0 %v2085
    %2110 = vmatprep.subr.bf16.mxu0 0
    %2111 = vmatpush1.bf16.msra.mxu0 %v2084
    %2112 = vmatprep.subr.bf16.mxu0 0
    %2113 = vmatpush2.bf16.msra.mxu0 0
    %2114 = vmatprep.subr.bf16.mxu0 0
    %2115 = vmatpush2.bf16.msra.mxu0 0
    %2116 = vmatprep.subr.bf16.mxu0 0
    %2117 = vmatpush2.bf16.msra.mxu0 0
    %2118 = vmatprep.subr.bf16.mxu0 0
    %2119 = vmatpush2.bf16.msra.mxu0 0
    %2120 = vmatprep.subr.bf16.mxu0 0
    %2121 = vmatpush2.bf16.msra.mxu0 0
    %2122 = vmatprep.subr.bf16.mxu0 0
    %2123 = vmatpush2.bf16.msra.mxu0 0
    %2124 = vmatprep.subr.bf16.mxu0 0
    %2125 = vmatpush2.bf16.msra.mxu0 0
    %2126 = vmatprep.subr.bf16.mxu0 0
    %2127 = vmatpush2.bf16.msra.mxu0 0
    %2128 = vmatprep.mubr.bf16.mxu0 0
    %2129 = vmatmul.mubr.bf16.gmra.mxu0 %v2094
    %v2130 = vpop.f32.mrf.mxu0
    %v2131 = vadd.f32 %v2066, %v2130
    %v2132 = vpop.f32.mrf.mxu0
    %v2133 = vpop.f32.mrf.mxu0
    %v2134 = vadd.f32 %v2066, %v2133
    %v2135 = vpop.f32.mrf.mxu0
    %2136 = vdwg.mxu0
    %v2139 = vrot.slane %v2131, 1
    %v2140 = vrot.slane %v2131, 2
    %v2141 = vrot.slane %v2131, 3
    %v2142 = vrot.slane %v2131, 4
    %v2143 = vrot.slane %v2131, 5
    %v2144 = vrot.slane %v2131, 6
    %v2145 = vrot.slane %v2131, 7
    %v2146 = vrot.slane %v2134, 1
    %v2147 = vrot.slane %v2134, 2
    %v2148 = vrot.slane %v2134, 3
    %v2149 = vrot.slane %v2134, 4
    %v2150 = vrot.slane %v2134, 5
    %v2151 = vrot.slane %v2134, 6
    %v2152 = vrot.slane %v2134, 7
    %v2169 = vadd.f32 %v1890, %v2131
    %v2170 = vadd.f32 %v1891, %v2139
    %v2171 = vadd.f32 %v1892, %v2140
    %v2172 = vadd.f32 %v1893, %v2141
    %v2173 = vadd.f32 %v1894, %v2142
    %v2174 = vadd.f32 %v1895, %v2143
    %v2175 = vadd.f32 %v1896, %v2144
    %v2176 = vadd.f32 %v1897, %v2145
    %v2177 = vadd.f32 %v1898, %v2134
    %v2178 = vadd.f32 %v1899, %v2146
    %v2179 = vadd.f32 %v1900, %v2147
    %v2180 = vadd.f32 %v1901, %v2148
    %v2181 = vadd.f32 %v1902, %v2149
    %v2182 = vadd.f32 %v1903, %v2150
    %v2183 = vadd.f32 %v1904, %v2151
    %v2184 = vadd.f32 %v1905, %v2152
    %v2185 = vld [vmem:[%s16] sm:$0x1]
    %v2186 = vld [vmem:[%s17] sm:$0x1]
    %v2203 = vrot.slane %v2170, 7
    %v2204 = vsel %vm288, %v2203, %v2169
    %v2205 = vrot.slane %v2171, 6
    %v2206 = vsel %vm291, %v2205, %v2204
    %v2207 = vrot.slane %v2172, 5
    %v2208 = vsel %vm294, %v2207, %v2206
    %v2209 = vrot.slane %v2173, 4
    %v2210 = vsel %vm297, %v2209, %v2208
    %v2211 = vrot.slane %v2174, 3
    %v2212 = vsel %vm300, %v2211, %v2210
    %v2213 = vrot.slane %v2175, 2
    %v2214 = vsel %vm303, %v2213, %v2212
    %v2215 = vrot.slane %v2176, 1
    %v2216 = vsel %vm306, %v2215, %v2214
    %v2217 = vrot.slane %v2178, 7
    %v2218 = vsel %vm288, %v2217, %v2177
    %v2219 = vrot.slane %v2179, 6
    %v2220 = vsel %vm291, %v2219, %v2218
    %v2221 = vrot.slane %v2180, 5
    %v2222 = vsel %vm294, %v2221, %v2220
    %v2223 = vrot.slane %v2181, 4
    %v2224 = vsel %vm297, %v2223, %v2222
    %v2225 = vrot.slane %v2182, 3
    %v2226 = vsel %vm300, %v2225, %v2224
    %v2227 = vrot.slane %v2183, 2
    %v2228 = vsel %vm303, %v2227, %v2226
    %v2229 = vrot.slane %v2184, 1
    %v2230 = vsel %vm306, %v2229, %v2228
    %v2233 = vsel %vm335, %v2216, 0.0
    %2234 = vadd.xlane.f32.xlu0 %v2233
    %v2235 = vpop.xlane.xlu0 %2234
    %v2236 = vsel %vm335, %v2230, 0.0
    %2237 = vadd.xlane.f32.xlu0 %v2236
    %v2238 = vpop.xlane.xlu0 %2237
    %v2239 = vmul.f32 %v2235, %v1689
    %v2240 = vmul.f32 %v2238, %v1689
    %v2243 = vrot.slane %v2239, 1
    %v2244 = vrot.slane %v2239, 2
    %v2245 = vrot.slane %v2239, 3
    %v2246 = vrot.slane %v2239, 4
    %v2247 = vrot.slane %v2239, 5
    %v2248 = vrot.slane %v2239, 6
    %v2249 = vrot.slane %v2239, 7
    %v2250 = vrot.slane %v2240, 1
    %v2251 = vrot.slane %v2240, 2
    %v2252 = vrot.slane %v2240, 3
    %v2253 = vrot.slane %v2240, 4
    %v2254 = vrot.slane %v2240, 5
    %v2255 = vrot.slane %v2240, 6
    %v2256 = vrot.slane %v2240, 7
    %v2273 = vsub.f32 %v2169, %v2239
    %v2274 = vsub.f32 %v2170, %v2243
    %v2275 = vsub.f32 %v2171, %v2244
    %v2276 = vsub.f32 %v2172, %v2245
    %v2277 = vsub.f32 %v2173, %v2246
    %v2278 = vsub.f32 %v2174, %v2247
    %v2279 = vsub.f32 %v2175, %v2248
    %v2280 = vsub.f32 %v2176, %v2249
    %v2281 = vsub.f32 %v2177, %v2240
    %v2282 = vsub.f32 %v2178, %v2250
    %v2283 = vsub.f32 %v2179, %v2251
    %v2284 = vsub.f32 %v2180, %v2252
    %v2285 = vsub.f32 %v2181, %v2253
    %v2286 = vsub.f32 %v2182, %v2254
    %v2287 = vsub.f32 %v2183, %v2255
    %v2288 = vsub.f32 %v2184, %v2256
    %v2289 = vmul.f32 %v2273, %v2273
    %v2290 = vmul.f32 %v2274, %v2274
    %v2291 = vmul.f32 %v2275, %v2275
    %v2292 = vmul.f32 %v2276, %v2276
    %v2293 = vmul.f32 %v2277, %v2277
    %v2294 = vmul.f32 %v2278, %v2278
    %v2295 = vmul.f32 %v2279, %v2279
    %v2296 = vmul.f32 %v2280, %v2280
    %v2297 = vmul.f32 %v2281, %v2281
    %v2298 = vmul.f32 %v2282, %v2282
    %v2299 = vmul.f32 %v2283, %v2283
    %v2300 = vmul.f32 %v2284, %v2284
    %v2301 = vmul.f32 %v2285, %v2285
    %v2302 = vmul.f32 %v2286, %v2286
    %v2303 = vmul.f32 %v2287, %v2287
    %v2304 = vmul.f32 %v2288, %v2288
    %v2321 = vrot.slane %v2290, 7
    %v2322 = vsel %vm288, %v2321, %v2289
    %v2323 = vrot.slane %v2291, 6
    %v2324 = vsel %vm291, %v2323, %v2322
    %v2325 = vrot.slane %v2292, 5
    %v2326 = vsel %vm294, %v2325, %v2324
    %v2327 = vrot.slane %v2293, 4
    %v2328 = vsel %vm297, %v2327, %v2326
    %v2329 = vrot.slane %v2294, 3
    %v2330 = vsel %vm300, %v2329, %v2328
    %v2331 = vrot.slane %v2295, 2
    %v2332 = vsel %vm303, %v2331, %v2330
    %v2333 = vrot.slane %v2296, 1
    %v2334 = vsel %vm306, %v2333, %v2332
    %v2335 = vrot.slane %v2298, 7
    %v2336 = vsel %vm288, %v2335, %v2297
    %v2337 = vrot.slane %v2299, 6
    %v2338 = vsel %vm291, %v2337, %v2336
    %v2339 = vrot.slane %v2300, 5
    %v2340 = vsel %vm294, %v2339, %v2338
    %v2341 = vrot.slane %v2301, 4
    %v2342 = vsel %vm297, %v2341, %v2340
    %v2343 = vrot.slane %v2302, 3
    %v2344 = vsel %vm300, %v2343, %v2342
    %v2345 = vrot.slane %v2303, 2
    %v2346 = vsel %vm303, %v2345, %v2344
    %v2347 = vrot.slane %v2304, 1
    %v2348 = vsel %vm306, %v2347, %v2346
    %v2351 = vsel %vm335, %v2334, 0.0
    %2352 = vadd.xlane.f32.xlu0 %v2351
    %v2353 = vpop.xlane.xlu0 %2352
    %v2354 = vsel %vm335, %v2348, 0.0
    %2355 = vadd.xlane.f32.xlu0 %v2354
    %v2356 = vpop.xlane.xlu0 %2355
    %v2357 = vmul.f32 %v2353, %v1689
    %v2358 = vmul.f32 %v2356, %v1689
    %v2359 = vadd.f32 %v2357, 1e-05
    %v2360 = vadd.f32 %v2358, 1e-05
    %v2361 = vrsqrt.pop %v2359
    %v2362 = vrsqrt.pop %v2360
    %v2365 = vrot.slane %v2361, 1
    %v2366 = vrot.slane %v2361, 2
    %v2367 = vrot.slane %v2361, 3
    %v2368 = vrot.slane %v2361, 4
    %v2369 = vrot.slane %v2361, 5
    %v2370 = vrot.slane %v2361, 6
    %v2371 = vrot.slane %v2361, 7
    %v2372 = vrot.slane %v2362, 1
    %v2373 = vrot.slane %v2362, 2
    %v2374 = vrot.slane %v2362, 3
    %v2375 = vrot.slane %v2362, 4
    %v2376 = vrot.slane %v2362, 5
    %v2377 = vrot.slane %v2362, 6
    %v2378 = vrot.slane %v2362, 7
    %v2395 = vmul.f32 %v2273, %v2361
    %v2396 = vmul.f32 %v2274, %v2365
    %v2397 = vmul.f32 %v2275, %v2366
    %v2398 = vmul.f32 %v2276, %v2367
    %v2399 = vmul.f32 %v2277, %v2368
    %v2400 = vmul.f32 %v2278, %v2369
    %v2401 = vmul.f32 %v2279, %v2370
    %v2402 = vmul.f32 %v2280, %v2371
    %v2403 = vmul.f32 %v2281, %v2362
    %v2404 = vmul.f32 %v2282, %v2372
    %v2405 = vmul.f32 %v2283, %v2373
    %v2406 = vmul.f32 %v2284, %v2374
    %v2407 = vmul.f32 %v2285, %v2375
    %v2408 = vmul.f32 %v2286, %v2376
    %v2409 = vmul.f32 %v2287, %v2377
    %v2410 = vmul.f32 %v2288, %v2378
    %v2412 = vlaneseq
    %v2413 = vshrl.u32 %v2412, 7
    %v2414 = vsub.s32 0, %v2413
    %v2415 = vrot.slane %v2185, %v2414
    %v2417 = vmul.f32 %v2395, %v2415
    %v2418 = vmul.f32 %v2396, %v2415
    %v2419 = vmul.f32 %v2397, %v2415
    %v2420 = vmul.f32 %v2398, %v2415
    %v2421 = vmul.f32 %v2399, %v2415
    %v2422 = vmul.f32 %v2400, %v2415
    %v2423 = vmul.f32 %v2401, %v2415
    %v2424 = vmul.f32 %v2402, %v2415
    %v2425 = vmul.f32 %v2403, %v2415
    %v2426 = vmul.f32 %v2404, %v2415
    %v2427 = vmul.f32 %v2405, %v2415
    %v2428 = vmul.f32 %v2406, %v2415
    %v2429 = vmul.f32 %v2407, %v2415
    %v2430 = vmul.f32 %v2408, %v2415
    %v2431 = vmul.f32 %v2409, %v2415
    %v2432 = vmul.f32 %v2410, %v2415
    %v2434 = vlaneseq
    %v2435 = vshrl.u32 %v2434, 7
    %v2436 = vsub.s32 0, %v2435
    %v2437 = vrot.slane %v2186, %v2436
    %v2439 = vadd.f32 %v2417, %v2437
    %v2440 = vadd.f32 %v2418, %v2437
    %v2441 = vadd.f32 %v2419, %v2437
    %v2442 = vadd.f32 %v2420, %v2437
    %v2443 = vadd.f32 %v2421, %v2437
    %v2444 = vadd.f32 %v2422, %v2437
    %v2445 = vadd.f32 %v2423, %v2437
    %v2446 = vadd.f32 %v2424, %v2437
    %v2447 = vadd.f32 %v2425, %v2437
    %v2448 = vadd.f32 %v2426, %v2437
    %v2449 = vadd.f32 %v2427, %v2437
    %v2450 = vadd.f32 %v2428, %v2437
    %v2451 = vadd.f32 %v2429, %v2437
    %v2452 = vadd.f32 %v2430, %v2437
    %v2453 = vadd.f32 %v2431, %v2437
    %v2454 = vadd.f32 %v2432, %v2437
    %v2463 = vrot.slane %v2447, 7
    %v2464 = vrot.slane %v2448, 7
    %v2465 = vrot.slane %v2449, 7
    %v2466 = vrot.slane %v2450, 7
    %v2467 = vrot.slane %v2451, 7
    %v2468 = vrot.slane %v2452, 7
    %v2469 = vrot.slane %v2453, 7
    %v2470 = vrot.slane %v2454, 7
    %vm2479 = vcmask 1040384
    %v2480 = vsel %vm2479, %v2439, %v2463
    %v2481 = vsel %vm2479, %v2440, %v2464
    %v2482 = vsel %vm2479, %v2441, %v2465
    %v2483 = vsel %vm2479, %v2442, %v2466
    %v2484 = vsel %vm2479, %v2443, %v2467
    %v2485 = vsel %vm2479, %v2444, %v2468
    %v2486 = vsel %vm2479, %v2445, %v2469
    %v2487 = vsel %vm2479, %v2446, %v2470
    %vm2488 = vcmask 254976
    %2489 = vst.msk [vmem:[#allocation14] sm:$0x3] %vm2488, %v2480
    %2490 = vst.msk [vmem:[#allocation14 + $0x2] sm:$0x3] %vm2488, %v2481
    %2491 = vst.msk [vmem:[#allocation14 + $0x4] sm:$0x3] %vm2488, %v2482
    %2492 = vst.msk [vmem:[#allocation14 + $0x6] sm:$0x3] %vm2488, %v2483
    %2493 = vst.msk [vmem:[#allocation14 + $0x8] sm:$0x3] %vm2488, %v2484
    %2494 = vst.msk [vmem:[#allocation14 + $0xa] sm:$0x3] %vm2488, %v2485
    %2495 = vst.msk [vmem:[#allocation14 + $0xc] sm:$0x3] %vm2488, %v2486
    %2496 = vst.msk [vmem:[#allocation14 + $0xe] sm:$0x3] %vm2488, %v2487
    // Predicated region
    $region102: #{tpu_custom_call.1} parent=1 // pred_check
      _
    $region103: #{tpu_custom_call.1} parent=1 // pred_check_branch
      %2498 = sbr.rel (0) target = $region105
    $region104: #{tpu_custom_call.1} parent=1 // pred_region
      %s2500 = ssub.s32 256, 256
      %2501 = vsyncadd [#allocation4], %s2500
      %s2502 = sshll.u32 [#allocation14], 4
      %s2503 = int_to_ptr.vmem [resolvable:$true] %s2502
      %2508 = dma.vmem_to_hbm [thread:$0]  %s2503, 256, %s18, [#allocation4], 32, 32, 2
    $region105: #{tpu_custom_call.1} parent=1 // pred_fallthru
      _
    // Predicated region
    $region106: #{tpu_custom_call.1} parent=1 // pred_check
      _
    $region107: #{tpu_custom_call.1} parent=1 // pred_check_branch
      %2510 = sbr.rel (0) target = $region109
    $region108: #{tpu_custom_call.1} parent=1 // pred_region
      %2511 = dma.done [#allocation4], 256
    $region109: #{tpu_custom_call.1} parent=1 // pred_fallthru
      _
    %2512 = vsyncpa [#allocation3], 1
    %2513 = vsyncpa [#allocation6], 1
    %2514 = vsyncpa [#allocation9], 1
    %2515 = vsyncpa [#allocation12], 1
    %2516 = vsyncpa [#allocation4], 1

</llo_original>
